<compile_context>
chip_gen: v5e
topology: v5e:2x2
jax: 0.10.0
libtpu: 0.0.40
codegen_flags: <defaults>
</compile_context>

<pallas_src>
import numpy as np
import jax
import jax.numpy as jnp
from jax import lax
from jax.experimental import pallas as pl
from jax.experimental.pallas import tpu as pltpu


def _round_up(x, m):
    return ((x + m - 1) // m) * m


def _l_spa_kernel(org_ref, enh_ref, pwt_ref, pwl_ref, pwr_ref,
                  ph_ref, phu_ref, phd_ref, out_ref):
    f32 = jnp.float32
    hi = lax.Precision.HIGHEST
    bt, C, H, W = org_ref.shape
    Wp = pwt_ref.shape[1]

    # Fused difference + channel mean (cast in-kernel; inputs may be bf16/u8/f32).
    # Summed slab-by-slab over C to keep the peak f32 working set small.
    dm = org_ref[:, 0].astype(f32) - enh_ref[:, 0].astype(f32)      # (bt, H, W)
    for c in range(1, C):
        dm = dm + (org_ref[:, c].astype(f32) - enh_ref[:, c].astype(f32))
    dm = dm * jnp.float32(1.0 / C)

    dm2 = dm.reshape(bt * H, W)                                     # (bt*H, W)

    # Stage 1 (batched over all images in the block): column avg-pool fused with
    # the left / right shift-differences.  Flat 2-D matmuls, M = bt*H.
    cc = jnp.dot(dm2, pwt_ref[...], preferred_element_type=f32, precision=hi)
    cl = jnp.dot(dm2, pwl_ref[...], preferred_element_type=f32, precision=hi)
    cr = jnp.dot(dm2, pwr_ref[...], preferred_element_type=f32, precision=hi)
    cc = cc.reshape(bt, H, Wp)
    cl = cl.reshape(bt, H, Wp)
    cr = cr.reshape(bt, H, Wp)

    ph = ph_ref[...]      # (Hp, H)  row avg-pool
    phu = phu_ref[...]    # (Hp, H)  row avg-pool fused with up-diff
    phd = phd_ref[...]    # (Hp, H)  row avg-pool fused with down-diff

    # Stage 2: row avg-pool fused with up/down differences.  These per-image
    # left-multiplies are already in MXU-canonical (K on lanes / sublanes) form;
    # bt is capped small (<= 8) so this static unroll stays short.
    for i in range(bt):
        d_l = jnp.dot(ph, cl[i], preferred_element_type=f32, precision=hi)
        d_r = jnp.dot(ph, cr[i], preferred_element_type=f32, precision=hi)
        d_u = jnp.dot(phu, cc[i], preferred_element_type=f32, precision=hi)
        d_d = jnp.dot(phd, cc[i], preferred_element_type=f32, precision=hi)
        out_ref[i] = d_l * d_l + d_r * d_r + d_u * d_u + d_d * d_d


def _vmem_capacity_bytes():
    try:
        cap = int(getattr(pltpu.get_tpu_info(), "vmem_capacity_bytes", 0))
        if cap > 0:
            return cap
    except Exception:
        pass
    return 64 << 20   # conservative fallback: v7x has 64 MiB per TensorCore


def l_spa(org, enhance, pool_size=4, vmem_budget_bytes=None):
    B, C, H, W = org.shape
    assert enhance.shape == org.shape
    assert H % pool_size == 0 and W % pool_size == 0
    Hp, Wp = H // pool_size, W // pool_size
    inv = np.float32(1.0 / pool_size)

    # ---- constant operators (numpy, f32) -------------------------------------
    ph = np.zeros((Hp, H), np.float32)                 # row avg-pool (left mult)
    for i in range(Hp):
        ph[i, i * pool_size:(i + 1) * pool_size] = inv
    pwt = np.zeros((W, Wp), np.float32)                # col avg-pool (right mult)
    for j in range(Wp):
        pwt[j * pool_size:(j + 1) * pool_size, j] = inv

    eye_w = np.eye(Wp, dtype=np.float32)
    eye_h = np.eye(Hp, dtype=np.float32)
    ml = eye_w - np.eye(Wp, k=1, dtype=np.float32)     # p[i,j] - p[i,j-1]
    mr = eye_w - np.eye(Wp, k=-1, dtype=np.float32)    # p[i,j] - p[i,j+1]
    mu = eye_h - np.eye(Hp, k=-1, dtype=np.float32)    # p[i,j] - p[i-1,j]
    md = eye_h - np.eye(Hp, k=1, dtype=np.float32)     # p[i,j] - p[i+1,j]

    # Pre-composed operators (associativity): dir(pool(x)) applied in two stages.
    pwl = pwt @ ml      # (W, Wp)
    pwr = pwt @ mr      # (W, Wp)
    phu = mu @ ph       # (Hp, H)
    phd = md @ ph       # (Hp, H)

    # ---- VMEM accounting with (sublane, lane) tile padding --------------------
    itemsize = int(jnp.dtype(org.dtype).itemsize)
    sub = 8 * max(1, 4 // itemsize)                    # f32->8, bf16->16, u8->32
    Hpad_in = _round_up(H, sub)
    Hpad8 = _round_up(H, 8)
    Wpad = _round_up(W, 128)
    Wp_pad = _round_up(Wp, 128)

    in_tile = C * Hpad_in * Wpad * itemsize            # one image, one input
    work = (4 * Hpad8 * Wpad * 4                       # f32 slab temps (dm etc.)
            + 3 * Hpad8 * Wp_pad * 4                   # cc / cl / cr
            + 8 * _round_up(Hp, 8) * Wp_pad * 4)       # stage-2 temps
    out_tile = _round_up(Hp, 8) * Wp_pad * 4
    const_bytes = 4 * (3 * _round_up(W, 8) * Wp_pad
                       + 3 * _round_up(Hp, 8) * _round_up(H, 128))

    cap = _vmem_capacity_bytes()
    if vmem_budget_bytes is None:
        vmem_budget_bytes = min(cap - (8 << 20), 56 << 20)

    def footprint(bt):
        return (4 * bt * in_tile            # double-buffered org + enh blocks
                + bt * work                 # in-kernel f32 intermediates
                + 2 * bt * out_tile         # double-buffered output block
                + 2 * const_bytes)          # operator blocks

    bt_cap = min(B, 8)                      # bounds the stage-2 unroll length
    if B >= 2:
        bt_cap = min(bt_cap, max(1, B // 2))  # >=2 grid steps for v7x's 2 TCs
    bt = 1
    for cand in range(1, bt_cap + 1):
        if footprint(cand) <= vmem_budget_bytes:
            bt = cand

    vmem_limit = int(min(max(2 * footprint(bt), 32 << 20),
                         cap - (4 << 20), 112 << 20))

    grid = (pl.cdiv(B, bt),)   # ragged last block: padded reads are per-image
                               # isolated, OOB writes are dropped by Pallas.

    out = pl.pallas_call(
        _l_spa_kernel,
        out_shape=jax.ShapeDtypeStruct((B, Hp, Wp), jnp.float32),
        grid_spec=pltpu.PrefetchScalarGridSpec(
            num_scalar_prefetch=0,
            grid=grid,
            in_specs=[
                pl.BlockSpec((bt, C, H, W), lambda b: (b, 0, 0, 0)),
                pl.BlockSpec((bt, C, H, W), lambda b: (b, 0, 0, 0)),
                pl.BlockSpec((W, Wp), lambda b: (0, 0)),   # pwt
                pl.BlockSpec((W, Wp), lambda b: (0, 0)),   # pwl
                pl.BlockSpec((W, Wp), lambda b: (0, 0)),   # pwr
                pl.BlockSpec((Hp, H), lambda b: (0, 0)),   # ph
                pl.BlockSpec((Hp, H), lambda b: (0, 0)),   # phu
                pl.BlockSpec((Hp, H), lambda b: (0, 0)),   # phd
            ],
            out_specs=pl.BlockSpec((bt, Hp, Wp), lambda b: (b, 0, 0)),
        ),
        compiler_params=pltpu.CompilerParams(
            dimension_semantics=("parallel",),
            vmem_limit_bytes=vmem_limit),
    )(org, enhance,
      jnp.asarray(pwt), jnp.asarray(pwl), jnp.asarray(pwr),
      jnp.asarray(ph), jnp.asarray(phu), jnp.asarray(phd))

    # Match the PyTorch output shape (B, 1, H//4, W//4).
    return out.reshape(B, 1, Hp, Wp)


def _reference(org, enh, pool_size=4):
    """Pure-JAX reference matching the PyTorch forward semantics."""
    org_mean = jnp.mean(org.astype(jnp.float32), axis=1, keepdims=True)
    enh_mean = jnp.mean(enh.astype(jnp.float32), axis=1, keepdims=True)

    def pool4(x):
        B, _, H, W = x.shape
        return x.reshape(B, 1, H // pool_size, pool_size,
                         W // pool_size, pool_size).mean(axis=(3, 5))

    op, ep = pool4(org_mean), pool4(enh_mean)

    def dirs(p):
        pad = jnp.pad(p, ((0, 0), (0, 0), (1, 1), (1, 1)))
        c = pad[:, :, 1:-1, 1:-1]
        left = pad[:, :, 1:-1, 0:-2]
        right = pad[:, :, 1:-1, 2:]
        up = pad[:, :, 0:-2, 1:-1]
        down = pad[:, :, 2:, 1:-1]
        return c - left, c - right, c - up, c - down

    o_l, o_r, o_u, o_d = dirs(op)
    e_l, e_r, e_u, e_d = dirs(ep)
    return ((o_l - e_l) ** 2 + (o_r - e_r) ** 2
            + (o_u - e_u) ** 2 + (o_d - e_d) ** 2)


if __name__ == "__main__":
    key = jax.random.PRNGKey(0)

    # Primary check: the module's nominal small shape.
    k1, k2, k3, k4 = jax.random.split(key, 4)
    B, C, H, W = 2, 4, 16, 16
    org = jax.random.uniform(k1, (B, C, H, W), dtype=jnp.float32)
    enhance = jax.random.uniform(k2, (B, C, H, W), dtype=jnp.float32)
    out = jax.block_until_ready(l_spa(org, enhance))
    ref = _reference(org, enhance)
    assert out.shape == ref.shape == (B, 1, H // 4, W // 4)
    if not np.allclose(np.asarray(out), np.asarray(ref), atol=1e-4, rtol=1e-4):
        raise AssertionError("Pallas kernel does not match reference (primary)")

    # Secondary check: odd batch -> exercises bt > 1 with a ragged (masked)
    # final grid block and the batched stage-1 path.
    B2, C2, H2, W2 = 5, 3, 32, 32
    org2 = jax.random.uniform(k3, (B2, C2, H2, W2), dtype=jnp.float32)
    enh2 = jax.random.uniform(k4, (B2, C2, H2, W2), dtype=jnp.float32)
    out2 = jax.block_until_ready(l_spa(org2, enh2))
    ref2 = _reference(org2, enh2)
    assert out2.shape == ref2.shape == (B2, 1, H2 // 4, W2 // 4)
    if not np.allclose(np.asarray(out2), np.asarray(ref2), atol=1e-4, rtol=1e-4):
        raise AssertionError("Pallas kernel does not match reference (ragged)")

    print("KERNEL_OK")
</pallas_src>

<mosaic_0001>
module attributes {stable_mosaic.version = 11 : i64} {
  func.func @_l_spa_kernel(%arg0: i32, %arg1: memref<1x4x16x16xf32, #tpu.memory_space<vmem>>, %arg2: memref<1x4x16x16xf32, #tpu.memory_space<vmem>>, %arg3: memref<16x4xf32, #tpu.memory_space<vmem>>, %arg4: memref<16x4xf32, #tpu.memory_space<vmem>>, %arg5: memref<16x4xf32, #tpu.memory_space<vmem>>, %arg6: memref<4x16xf32, #tpu.memory_space<vmem>>, %arg7: memref<4x16xf32, #tpu.memory_space<vmem>>, %arg8: memref<4x16xf32, #tpu.memory_space<vmem>>, %arg9: memref<1x4x4xf32, #tpu.memory_space<vmem>>) attributes {dimension_semantics = [#tpu.dimension_semantics<parallel>], iteration_bounds = array<i64: 2>, scalar_prefetch = 0 : i64, scratch_operands = 0 : i64, tpu.core_type = #tpu.core_type<tc>, window_params = [{transform_indices = @transform_0, window_bounds = array<i64: 1, 4, 16, 16>}, {transform_indices = @transform_1, window_bounds = array<i64: 1, 4, 16, 16>}, {pipeline_mode = #tpu.pipeline_mode<synchronous>, transform_indices = @transform_2, window_bounds = array<i64: 16, 4>}, {pipeline_mode = #tpu.pipeline_mode<synchronous>, transform_indices = @transform_3, window_bounds = array<i64: 16, 4>}, {pipeline_mode = #tpu.pipeline_mode<synchronous>, transform_indices = @transform_4, window_bounds = array<i64: 16, 4>}, {pipeline_mode = #tpu.pipeline_mode<synchronous>, transform_indices = @transform_5, window_bounds = array<i64: 4, 16>}, {pipeline_mode = #tpu.pipeline_mode<synchronous>, transform_indices = @transform_6, window_bounds = array<i64: 4, 16>}, {pipeline_mode = #tpu.pipeline_mode<synchronous>, transform_indices = @transform_7, window_bounds = array<i64: 4, 16>}, {transform_indices = @transform_8, window_bounds = array<i64: 1, 4, 4>}]} {
    %c0 = arith.constant 0 : index
    %c0_0 = arith.constant 0 : index
    %c0_1 = arith.constant 0 : index
    %c0_2 = arith.constant 0 : index
    %0 = vector.load %arg1[%c0, %c0_0, %c0_1, %c0_2] : memref<1x4x16x16xf32, #tpu.memory_space<vmem>>, vector<1x1x16x16xf32>
    %1 = vector.shape_cast %0 : vector<1x1x16x16xf32> to vector<1x16x16xf32>
    %c0_3 = arith.constant 0 : index
    %c0_4 = arith.constant 0 : index
    %c0_5 = arith.constant 0 : index
    %c0_6 = arith.constant 0 : index
    %2 = vector.load %arg2[%c0_3, %c0_4, %c0_5, %c0_6] : memref<1x4x16x16xf32, #tpu.memory_space<vmem>>, vector<1x1x16x16xf32>
    %3 = vector.shape_cast %2 : vector<1x1x16x16xf32> to vector<1x16x16xf32>
    %4 = arith.subf %1, %3 : vector<1x16x16xf32>
    %c0_7 = arith.constant 0 : index
    %c1 = arith.constant 1 : index
    %c0_8 = arith.constant 0 : index
    %c0_9 = arith.constant 0 : index
    %5 = vector.load %arg1[%c0_7, %c1, %c0_8, %c0_9] : memref<1x4x16x16xf32, #tpu.memory_space<vmem>>, vector<1x1x16x16xf32>
    %6 = vector.shape_cast %5 : vector<1x1x16x16xf32> to vector<1x16x16xf32>
    %c0_10 = arith.constant 0 : index
    %c1_11 = arith.constant 1 : index
    %c0_12 = arith.constant 0 : index
    %c0_13 = arith.constant 0 : index
    %7 = vector.load %arg2[%c0_10, %c1_11, %c0_12, %c0_13] : memref<1x4x16x16xf32, #tpu.memory_space<vmem>>, vector<1x1x16x16xf32>
    %8 = vector.shape_cast %7 : vector<1x1x16x16xf32> to vector<1x16x16xf32>
    %9 = arith.subf %6, %8 : vector<1x16x16xf32>
    %10 = arith.addf %4, %9 : vector<1x16x16xf32>
    %c0_14 = arith.constant 0 : index
    %c2 = arith.constant 2 : index
    %c0_15 = arith.constant 0 : index
    %c0_16 = arith.constant 0 : index
    %11 = vector.load %arg1[%c0_14, %c2, %c0_15, %c0_16] : memref<1x4x16x16xf32, #tpu.memory_space<vmem>>, vector<1x1x16x16xf32>
    %12 = vector.shape_cast %11 : vector<1x1x16x16xf32> to vector<1x16x16xf32>
    %c0_17 = arith.constant 0 : index
    %c2_18 = arith.constant 2 : index
    %c0_19 = arith.constant 0 : index
    %c0_20 = arith.constant 0 : index
    %13 = vector.load %arg2[%c0_17, %c2_18, %c0_19, %c0_20] : memref<1x4x16x16xf32, #tpu.memory_space<vmem>>, vector<1x1x16x16xf32>
    %14 = vector.shape_cast %13 : vector<1x1x16x16xf32> to vector<1x16x16xf32>
    %15 = arith.subf %12, %14 : vector<1x16x16xf32>
    %16 = arith.addf %10, %15 : vector<1x16x16xf32>
    %c0_21 = arith.constant 0 : index
    %c3 = arith.constant 3 : index
    %c0_22 = arith.constant 0 : index
    %c0_23 = arith.constant 0 : index
    %17 = vector.load %arg1[%c0_21, %c3, %c0_22, %c0_23] : memref<1x4x16x16xf32, #tpu.memory_space<vmem>>, vector<1x1x16x16xf32>
    %18 = vector.shape_cast %17 : vector<1x1x16x16xf32> to vector<1x16x16xf32>
    %c0_24 = arith.constant 0 : index
    %c3_25 = arith.constant 3 : index
    %c0_26 = arith.constant 0 : index
    %c0_27 = arith.constant 0 : index
    %19 = vector.load %arg2[%c0_24, %c3_25, %c0_26, %c0_27] : memref<1x4x16x16xf32, #tpu.memory_space<vmem>>, vector<1x1x16x16xf32>
    %20 = vector.shape_cast %19 : vector<1x1x16x16xf32> to vector<1x16x16xf32>
    %21 = arith.subf %18, %20 : vector<1x16x16xf32>
    %22 = arith.addf %16, %21 : vector<1x16x16xf32>
    %cst = arith.constant 2.500000e-01 : f32
    %23 = vector.broadcast %cst : f32 to vector<1x16x16xf32>
    %24 = arith.mulf %22, %23 : vector<1x16x16xf32>
    %25 = vector.shape_cast %24 : vector<1x16x16xf32> to vector<16x16xf32>
    %c0_28 = arith.constant 0 : index
    %c0_29 = arith.constant 0 : index
    %26 = vector.load %arg3[%c0_28, %c0_29] : memref<16x4xf32, #tpu.memory_space<vmem>>, vector<16x4xf32>
    %cst_30 = arith.constant dense<0.000000e+00> : vector<16x4xf32>
    %27 = tpu.matmul %25, %26, %cst_30 {dimension_numbers = #tpu.dot_dimension_numbers<[1], [0], [0], [1], [0, 0, 1, 1], [], []>, precision = #tpu.contract_precision<fp32>} : vector<16x16xf32>, vector<16x4xf32>, vector<16x4xf32> -> vector<16x4xf32>
    %c0_31 = arith.constant 0 : index
    %c0_32 = arith.constant 0 : index
    %28 = vector.load %arg4[%c0_31, %c0_32] : memref<16x4xf32, #tpu.memory_space<vmem>>, vector<16x4xf32>
    %cst_33 = arith.constant dense<0.000000e+00> : vector<16x4xf32>
    %29 = tpu.matmul %25, %28, %cst_33 {dimension_numbers = #tpu.dot_dimension_numbers<[1], [0], [0], [1], [0, 0, 1, 1], [], []>, precision = #tpu.contract_precision<fp32>} : vector<16x16xf32>, vector<16x4xf32>, vector<16x4xf32> -> vector<16x4xf32>
    %c0_34 = arith.constant 0 : index
    %c0_35 = arith.constant 0 : index
    %30 = vector.load %arg5[%c0_34, %c0_35] : memref<16x4xf32, #tpu.memory_space<vmem>>, vector<16x4xf32>
    %cst_36 = arith.constant dense<0.000000e+00> : vector<16x4xf32>
    %31 = tpu.matmul %25, %30, %cst_36 {dimension_numbers = #tpu.dot_dimension_numbers<[1], [0], [0], [1], [0, 0, 1, 1], [], []>, precision = #tpu.contract_precision<fp32>} : vector<16x16xf32>, vector<16x4xf32>, vector<16x4xf32> -> vector<16x4xf32>
    %32 = vector.shape_cast %27 : vector<16x4xf32> to vector<1x16x4xf32>
    %33 = vector.shape_cast %29 : vector<16x4xf32> to vector<1x16x4xf32>
    %34 = vector.shape_cast %31 : vector<16x4xf32> to vector<1x16x4xf32>
    %c0_37 = arith.constant 0 : index
    %c0_38 = arith.constant 0 : index
    %35 = vector.load %arg6[%c0_37, %c0_38] : memref<4x16xf32, #tpu.memory_space<vmem>>, vector<4x16xf32>
    %c0_39 = arith.constant 0 : index
    %c0_40 = arith.constant 0 : index
    %36 = vector.load %arg7[%c0_39, %c0_40] : memref<4x16xf32, #tpu.memory_space<vmem>>, vector<4x16xf32>
    %c0_41 = arith.constant 0 : index
    %c0_42 = arith.constant 0 : index
    %37 = vector.load %arg8[%c0_41, %c0_42] : memref<4x16xf32, #tpu.memory_space<vmem>>, vector<4x16xf32>
    %38 = vector.shape_cast %33 : vector<1x16x4xf32> to vector<16x4xf32>
    %cst_43 = arith.constant dense<0.000000e+00> : vector<4x4xf32>
    %39 = tpu.matmul %35, %38, %cst_43 {dimension_numbers = #tpu.dot_dimension_numbers<[1], [0], [0], [1], [0, 0, 1, 1], [], []>, precision = #tpu.contract_precision<fp32>} : vector<4x16xf32>, vector<16x4xf32>, vector<4x4xf32> -> vector<4x4xf32>
    %40 = vector.shape_cast %34 : vector<1x16x4xf32> to vector<16x4xf32>
    %cst_44 = arith.constant dense<0.000000e+00> : vector<4x4xf32>
    %41 = tpu.matmul %35, %40, %cst_44 {dimension_numbers = #tpu.dot_dimension_numbers<[1], [0], [0], [1], [0, 0, 1, 1], [], []>, precision = #tpu.contract_precision<fp32>} : vector<4x16xf32>, vector<16x4xf32>, vector<4x4xf32> -> vector<4x4xf32>
    %42 = vector.shape_cast %32 : vector<1x16x4xf32> to vector<16x4xf32>
    %cst_45 = arith.constant dense<0.000000e+00> : vector<4x4xf32>
    %43 = tpu.matmul %36, %42, %cst_45 {dimension_numbers = #tpu.dot_dimension_numbers<[1], [0], [0], [1], [0, 0, 1, 1], [], []>, precision = #tpu.contract_precision<fp32>} : vector<4x16xf32>, vector<16x4xf32>, vector<4x4xf32> -> vector<4x4xf32>
    %44 = vector.shape_cast %32 : vector<1x16x4xf32> to vector<16x4xf32>
    %cst_46 = arith.constant dense<0.000000e+00> : vector<4x4xf32>
    %45 = tpu.matmul %37, %44, %cst_46 {dimension_numbers = #tpu.dot_dimension_numbers<[1], [0], [0], [1], [0, 0, 1, 1], [], []>, precision = #tpu.contract_precision<fp32>} : vector<4x16xf32>, vector<16x4xf32>, vector<4x4xf32> -> vector<4x4xf32>
    %46 = arith.mulf %39, %39 : vector<4x4xf32>
    %47 = arith.mulf %41, %41 : vector<4x4xf32>
    %48 = arith.addf %46, %47 : vector<4x4xf32>
    %49 = arith.mulf %43, %43 : vector<4x4xf32>
    %50 = arith.addf %48, %49 : vector<4x4xf32>
    %51 = arith.mulf %45, %45 : vector<4x4xf32>
    %52 = arith.addf %50, %51 : vector<4x4xf32>
    %c0_47 = arith.constant 0 : index
    %c0_48 = arith.constant 0 : index
    %c0_49 = arith.constant 0 : index
    %53 = vector.load %arg9[%c0_47, %c0_48, %c0_49] : memref<1x4x4xf32, #tpu.memory_space<vmem>>, vector<1x4x4xf32>
    %54 = vector.shape_cast %53 : vector<1x4x4xf32> to vector<4x4xf32>
    %55 = vector.shape_cast %52 : vector<4x4xf32> to vector<1x4x4xf32>
    tpu.vector_store %arg9[%c0_47, %c0_48, %c0_49], %55 {strides = array<i32>} : memref<1x4x4xf32, #tpu.memory_space<vmem>>, vector<1x4x4xf32>,
    return
  }
  func.func @transform_0(%arg0: i32) -> (i32, i32, i32, i32) {
    %c0_i32 = arith.constant 0 : i32
    %c0_i32_0 = arith.constant 0 : i32
    %c0_i32_1 = arith.constant 0 : i32
    %c0_i32_2 = arith.constant 0 : i32
    return %arg0, %c0_i32, %c0_i32_0, %c0_i32_1 : i32, i32, i32, i32
  }
  func.func @transform_1(%arg0: i32) -> (i32, i32, i32, i32) {
    %c0_i32 = arith.constant 0 : i32
    %c0_i32_0 = arith.constant 0 : i32
    %c0_i32_1 = arith.constant 0 : i32
    %c0_i32_2 = arith.constant 0 : i32
    return %arg0, %c0_i32, %c0_i32_0, %c0_i32_1 : i32, i32, i32, i32
  }
  func.func @transform_2(%arg0: i32) -> (i32, i32) {
    %c0_i32 = arith.constant 0 : i32
    %c0_i32_0 = arith.constant 0 : i32
    %c0_i32_1 = arith.constant 0 : i32
    return %c0_i32, %c0_i32_0 : i32, i32
  }
  func.func @transform_3(%arg0: i32) -> (i32, i32) {
    %c0_i32 = arith.constant 0 : i32
    %c0_i32_0 = arith.constant 0 : i32
    %c0_i32_1 = arith.constant 0 : i32
    return %c0_i32, %c0_i32_0 : i32, i32
  }
  func.func @transform_4(%arg0: i32) -> (i32, i32) {
    %c0_i32 = arith.constant 0 : i32
    %c0_i32_0 = arith.constant 0 : i32
    %c0_i32_1 = arith.constant 0 : i32
    return %c0_i32, %c0_i32_0 : i32, i32
  }
  func.func @transform_5(%arg0: i32) -> (i32, i32) {
    %c0_i32 = arith.constant 0 : i32
    %c0_i32_0 = arith.constant 0 : i32
    %c0_i32_1 = arith.constant 0 : i32
    return %c0_i32, %c0_i32_0 : i32, i32
  }
  func.func @transform_6(%arg0: i32) -> (i32, i32) {
    %c0_i32 = arith.constant 0 : i32
    %c0_i32_0 = arith.constant 0 : i32
    %c0_i32_1 = arith.constant 0 : i32
    return %c0_i32, %c0_i32_0 : i32, i32
  }
  func.func @transform_7(%arg0: i32) -> (i32, i32) {
    %c0_i32 = arith.constant 0 : i32
    %c0_i32_0 = arith.constant 0 : i32
    %c0_i32_1 = arith.constant 0 : i32
    return %c0_i32, %c0_i32_0 : i32, i32
  }
  func.func @transform_8(%arg0: i32) -> (i32, i32, i32) {
    %c0_i32 = arith.constant 0 : i32
    %c0_i32_0 = arith.constant 0 : i32
    %c0_i32_1 = arith.constant 0 : i32
    return %arg0, %c0_i32, %c0_i32_0 : i32, i32, i32
  }
}

</mosaic_0001>

<llo_original>
// kernel: tpu_custom_call.1
$region0: #{tpu_custom_call.1}
  #allocation0 [shape = 'u32[]', space=smem, size = 0x4, offset = 0x4, fixed_abs, tag = 'smem constant byte address 0x4 - core index']
  #allocation1 [shape = 'u32[72,128]{1,0:T(1,128)}', space=vmem, size = 0x9000, scoped, tag = 'internal scratch']
  %s0 = inlined_call_operand.hbm [shape: f32[2,4,16,16], index: 0, kind: input, shape index: {}]
  %s1 = inlined_call_operand.hbm [shape: f32[2,4,16,16], index: 1, kind: input, shape index: {}]
  %s2 = inlined_call_operand.vmem [shape: f32[16,4], index: 2, kind: input, shape index: {}]
  %s3 = inlined_call_operand.vmem [shape: f32[16,4], index: 3, kind: input, shape index: {}]
  %s4 = inlined_call_operand.vmem [shape: f32[16,4], index: 4, kind: input, shape index: {}]
  %s5 = inlined_call_operand.vmem [shape: f32[4,16], index: 5, kind: input, shape index: {}]
  %s6 = inlined_call_operand.vmem [shape: f32[4,16], index: 6, kind: input, shape index: {}]
  %s7 = inlined_call_operand.vmem [shape: f32[4,16], index: 7, kind: input, shape index: {}]
  %s8 = inlined_call_operand.hbm [shape: f32[2,4,4], index: 8, kind: output, shape index: {}]
  %s9 = sld [smem:[#allocation0]]
  $region73: #{tpu_custom_call.1} parent=0
    _
  %s11 = ssub.s32 1, %s9
  %s12 = scalar_select 0, %s11, %s9
  $region1: #{tpu_custom_call.1} parent=0
    #allocation2 [shape = 'u8[65536]{0}', space=vmem, size = 0x10000, scoped, tag = 'input window, operand 0']
    #allocation3 [shape = 's32[2]{0}', space=sflag, size = 0x8, scoped, tag = 'scoped memory for tpu_custom_call.1']
    #allocation4 [shape = 's32[2]{0}', space=sflag, size = 0x8, scoped, tag = 'scoped memory for tpu_custom_call.1']
    #allocation5 [shape = 'u8[65536]{0}', space=vmem, size = 0x10000, scoped, tag = 'input window, operand 1']
    #allocation6 [shape = 's32[2]{0}', space=sflag, size = 0x8, scoped, tag = 'scoped memory for tpu_custom_call.1']
    #allocation7 [shape = 'u8[4096]{0}', space=vmem, size = 0x1000, scoped, tag = 'output window, operand 0']
    %13 = vsyncpa [#allocation3], 0
    %s14 = scalar_lea.sflag [#allocation3], 1
    %15 = vsyncpa %s14, 0
    %16 = vsyncpa [#allocation6], 0
    %s17 = scalar_lea.sflag [#allocation6], 1
    %18 = vsyncpa %s17, 0
    %19 = vsyncpa [#allocation4], 0
    %s20 = scalar_lea.sflag [#allocation4], 1
    %21 = vsyncpa %s20, 0
    loop: start=0, step=1, limit=4
    $region2: #{tpu_custom_call.1} parent=1 // loop_pre_header
      _
    $region3: #{tpu_custom_call.1} parent=1 // loop_header
      %s23 = sphi 0, %s27
      %p24 = scmp.ge.s32.totalorder %s23, 4
      %s33 = sphi 0, %s35
      %s36 = sphi 0, %s33
      %s37 = sphi 0, %s36
      %s53 = sphi 0, %s37
      %s59 = sphi 0, %s61
      %s62 = sphi 0, %s59
      %s63 = sphi 0, %s62
      %s79 = sphi 0, %s63
      %s83 = sphi 0, %s83
      %s85 = sphi 0, %s83
      %s86 = sphi 0, %s85
      %s100 = sphi 0, %s86
      %s104 = sphi 0, %s104
      %s106 = sphi 0, %s104
      %s107 = sphi 0, %s106
      %s121 = sphi 0, %s107
      %s125 = sphi 0, %s125
      %s127 = sphi 0, %s125
      %s128 = sphi 0, %s127
      %s142 = sphi 0, %s128
      %s146 = sphi 0, %s146
      %s148 = sphi 0, %s146
      %s149 = sphi 0, %s148
      %s163 = sphi 0, %s149
      %s167 = sphi 0, %s167
      %s169 = sphi 0, %s167
      %s170 = sphi 0, %s169
      %s184 = sphi 0, %s170
      %s188 = sphi 0, %s188
      %s190 = sphi 0, %s188
      %s191 = sphi 0, %s190
      %s205 = sphi 0, %s191
      %s211 = sphi 0, %s213
      %s214 = sphi 0, %s211
      %s215 = sphi 0, %s214
      %s231 = sphi 0, %s215
    $region4: #{tpu_custom_call.1} parent=1 // loop_header_branch
      %26 = sbr.rel (%p24) target = $region8
    $region5: #{tpu_custom_call.1} parent=1 // loop_body
      %s28 = ssub.s32 %s23, 1
      %s29 = ssub.s32 %s23, 2
      %s30 = sadd.s32 %s23, 1
      %s31 = ssub.s32 %s23, %s30
      %p32 = scmp.eq.s32.totalorder %s31, 0
      %s34 = sadd.s32 %s33, 1
      %s35 = scalar_select %p32, %s33, %s34
      %p38 = pneg %p32
      %p39 = scmp.eq.s32.totalorder %s23, 1
      %p40 = por %p38, %p39
      %p41 = scmp.ne.s32.totalorder %s33, %s36
      %p42 = scmp.eq.s32.totalorder %s23, 0
      %p43 = por %p41, %p42
      %p44 = scmp.ne.s32.totalorder %s33, %s36
      %p45 = scmp.eq.s32.totalorder %s28, 1
      %p46 = por %p44, %p45
      %p47 = scmp.ne.s32.totalorder %s36, %s37
      %p48 = scmp.eq.s32.totalorder %s28, 0
      %p49 = por %p47, %p48
      %p50 = scmp.ne.s32.totalorder %s36, %s37
      %p51 = scmp.eq.s32.totalorder %s29, 1
      %p52 = por %p50, %p51
      %p54 = scmp.ne.s32.totalorder %s37, %s53
      %p55 = scmp.eq.s32.totalorder %s29, 0
      %p56 = por %p54, %p55
      %s57 = ssub.s32 %s23, %s30
      %p58 = scmp.eq.s32.totalorder %s57, 0
      %s60 = sadd.s32 %s59, 1
      %s61 = scalar_select %p58, %s59, %s60
      %p64 = pneg %p58
      %p65 = scmp.eq.s32.totalorder %s23, 1
      %p66 = por %p64, %p65
      %p67 = scmp.ne.s32.totalorder %s59, %s62
      %p68 = scmp.eq.s32.totalorder %s23, 0
      %p69 = por %p67, %p68
      %p70 = scmp.ne.s32.totalorder %s59, %s62
      %p71 = scmp.eq.s32.totalorder %s28, 1
      %p72 = por %p70, %p71
      %p73 = scmp.ne.s32.totalorder %s62, %s63
      %p74 = scmp.eq.s32.totalorder %s28, 0
      %p75 = por %p73, %p74
      %p76 = scmp.ne.s32.totalorder %s62, %s63
      %p77 = scmp.eq.s32.totalorder %s29, 1
      %p78 = por %p76, %p77
      %p80 = scmp.ne.s32.totalorder %s63, %s79
      %p81 = scmp.eq.s32.totalorder %s29, 0
      %p82 = por %p80, %p81
      %s84 = sadd.s32 %s83, 1
      %p87 = scmp.eq.s32.totalorder %s23, 1
      %p88 = scmp.ne.s32.totalorder %s83, %s85
      %p89 = scmp.eq.s32.totalorder %s23, 0
      %p90 = por %p88, %p89
      %p91 = scmp.ne.s32.totalorder %s83, %s85
      %p92 = scmp.eq.s32.totalorder %s28, 1
      %p93 = por %p91, %p92
      %p94 = scmp.ne.s32.totalorder %s85, %s86
      %p95 = scmp.eq.s32.totalorder %s28, 0
      %p96 = por %p94, %p95
      %p97 = scmp.ne.s32.totalorder %s85, %s86
      %p98 = scmp.eq.s32.totalorder %s29, 1
      %p99 = por %p97, %p98
      %p101 = scmp.ne.s32.totalorder %s86, %s100
      %p102 = scmp.eq.s32.totalorder %s29, 0
      %p103 = por %p101, %p102
      %s105 = sadd.s32 %s104, 1
      %p108 = scmp.eq.s32.totalorder %s23, 1
      %p109 = scmp.ne.s32.totalorder %s104, %s106
      %p110 = scmp.eq.s32.totalorder %s23, 0
      %p111 = por %p109, %p110
      %p112 = scmp.ne.s32.totalorder %s104, %s106
      %p113 = scmp.eq.s32.totalorder %s28, 1
      %p114 = por %p112, %p113
      %p115 = scmp.ne.s32.totalorder %s106, %s107
      %p116 = scmp.eq.s32.totalorder %s28, 0
      %p117 = por %p115, %p116
      %p118 = scmp.ne.s32.totalorder %s106, %s107
      %p119 = scmp.eq.s32.totalorder %s29, 1
      %p120 = por %p118, %p119
      %p122 = scmp.ne.s32.totalorder %s107, %s121
      %p123 = scmp.eq.s32.totalorder %s29, 0
      %p124 = por %p122, %p123
      %s126 = sadd.s32 %s125, 1
      %p129 = scmp.eq.s32.totalorder %s23, 1
      %p130 = scmp.ne.s32.totalorder %s125, %s127
      %p131 = scmp.eq.s32.totalorder %s23, 0
      %p132 = por %p130, %p131
      %p133 = scmp.ne.s32.totalorder %s125, %s127
      %p134 = scmp.eq.s32.totalorder %s28, 1
      %p135 = por %p133, %p134
      %p136 = scmp.ne.s32.totalorder %s127, %s128
      %p137 = scmp.eq.s32.totalorder %s28, 0
      %p138 = por %p136, %p137
      %p139 = scmp.ne.s32.totalorder %s127, %s128
      %p140 = scmp.eq.s32.totalorder %s29, 1
      %p141 = por %p139, %p140
      %p143 = scmp.ne.s32.totalorder %s128, %s142
      %p144 = scmp.eq.s32.totalorder %s29, 0
      %p145 = por %p143, %p144
      %s147 = sadd.s32 %s146, 1
      %p150 = scmp.eq.s32.totalorder %s23, 1
      %p151 = scmp.ne.s32.totalorder %s146, %s148
      %p152 = scmp.eq.s32.totalorder %s23, 0
      %p153 = por %p151, %p152
      %p154 = scmp.ne.s32.totalorder %s146, %s148
      %p155 = scmp.eq.s32.totalorder %s28, 1
      %p156 = por %p154, %p155
      %p157 = scmp.ne.s32.totalorder %s148, %s149
      %p158 = scmp.eq.s32.totalorder %s28, 0
      %p159 = por %p157, %p158
      %p160 = scmp.ne.s32.totalorder %s148, %s149
      %p161 = scmp.eq.s32.totalorder %s29, 1
      %p162 = por %p160, %p161
      %p164 = scmp.ne.s32.totalorder %s149, %s163
      %p165 = scmp.eq.s32.totalorder %s29, 0
      %p166 = por %p164, %p165
      %s168 = sadd.s32 %s167, 1
      %p171 = scmp.eq.s32.totalorder %s23, 1
      %p172 = scmp.ne.s32.totalorder %s167, %s169
      %p173 = scmp.eq.s32.totalorder %s23, 0
      %p174 = por %p172, %p173
      %p175 = scmp.ne.s32.totalorder %s167, %s169
      %p176 = scmp.eq.s32.totalorder %s28, 1
      %p177 = por %p175, %p176
      %p178 = scmp.ne.s32.totalorder %s169, %s170
      %p179 = scmp.eq.s32.totalorder %s28, 0
      %p180 = por %p178, %p179
      %p181 = scmp.ne.s32.totalorder %s169, %s170
      %p182 = scmp.eq.s32.totalorder %s29, 1
      %p183 = por %p181, %p182
      %p185 = scmp.ne.s32.totalorder %s170, %s184
      %p186 = scmp.eq.s32.totalorder %s29, 0
      %p187 = por %p185, %p186
      %s189 = sadd.s32 %s188, 1
      %p192 = scmp.eq.s32.totalorder %s23, 1
      %p193 = scmp.ne.s32.totalorder %s188, %s190
      %p194 = scmp.eq.s32.totalorder %s23, 0
      %p195 = por %p193, %p194
      %p196 = scmp.ne.s32.totalorder %s188, %s190
      %p197 = scmp.eq.s32.totalorder %s28, 1
      %p198 = por %p196, %p197
      %p199 = scmp.ne.s32.totalorder %s190, %s191
      %p200 = scmp.eq.s32.totalorder %s28, 0
      %p201 = por %p199, %p200
      %p202 = scmp.ne.s32.totalorder %s190, %s191
      %p203 = scmp.eq.s32.totalorder %s29, 1
      %p204 = por %p202, %p203
      %p206 = scmp.ne.s32.totalorder %s191, %s205
      %p207 = scmp.eq.s32.totalorder %s29, 0
      %p208 = por %p206, %p207
      %s209 = ssub.s32 %s23, %s30
      %p210 = scmp.eq.s32.totalorder %s209, 0
      %s212 = sadd.s32 %s211, 1
      %s213 = scalar_select %p210, %s211, %s212
      %p216 = pneg %p210
      %p217 = scmp.eq.s32.totalorder %s23, 1
      %p218 = por %p216, %p217
      %p219 = scmp.ne.s32.totalorder %s211, %s214
      %p220 = scmp.eq.s32.totalorder %s23, 0
      %p221 = por %p219, %p220
      %p222 = scmp.ne.s32.totalorder %s211, %s214
      %p223 = scmp.eq.s32.totalorder %s28, 1
      %p224 = por %p222, %p223
      %p225 = scmp.ne.s32.totalorder %s214, %s215
      %p226 = scmp.eq.s32.totalorder %s28, 0
      %p227 = por %p225, %p226
      %p228 = scmp.ne.s32.totalorder %s214, %s215
      %p229 = scmp.eq.s32.totalorder %s29, 1
      %p230 = por %p228, %p229
      %p232 = scmp.ne.s32.totalorder %s215, %s231
      %p233 = scmp.eq.s32.totalorder %s29, 0
      %p234 = por %p232, %p233
      %p235 = scmp.le.s32.totalorder 1, %s23
      %p236 = scmp.lt.s32.totalorder %s23, 3
      %p237 = pnand %p235, %p236
      %p238 = pneg %p237
      // Predicated region
      $region9: #{tpu_custom_call.1} parent=5 // pred_check
        _
      $region10: #{tpu_custom_call.1} parent=5 // pred_check_branch
        %240 = sbr.rel (%p237) target = $region12
      $region11: #{tpu_custom_call.1} parent=5 // pred_region
        %s241 = ssub.s32 %s23, 1
        // Predicated region
        $region13: #{tpu_custom_call.1} parent=11 // pred_check
          %p242 = pneg %p96
        $region14: #{tpu_custom_call.1} parent=11 // pred_check_branch
          %244 = sbr.rel (%p242) target = $region16
        $region15: #{tpu_custom_call.1} parent=11 // pred_region
          _
        $region16: #{tpu_custom_call.1} parent=11 // pred_fallthru
          _
        // Predicated region
        $region17: #{tpu_custom_call.1} parent=11 // pred_check
          %p245 = pneg %p117
        $region18: #{tpu_custom_call.1} parent=11 // pred_check_branch
          %247 = sbr.rel (%p245) target = $region20
        $region19: #{tpu_custom_call.1} parent=11 // pred_region
          _
        $region20: #{tpu_custom_call.1} parent=11 // pred_fallthru
          _
        // Predicated region
        $region21: #{tpu_custom_call.1} parent=11 // pred_check
          %p248 = pneg %p138
        $region22: #{tpu_custom_call.1} parent=11 // pred_check_branch
          %250 = sbr.rel (%p248) target = $region24
        $region23: #{tpu_custom_call.1} parent=11 // pred_region
          _
        $region24: #{tpu_custom_call.1} parent=11 // pred_fallthru
          _
        // Predicated region
        $region25: #{tpu_custom_call.1} parent=11 // pred_check
          %p251 = pneg %p159
        $region26: #{tpu_custom_call.1} parent=11 // pred_check_branch
          %253 = sbr.rel (%p251) target = $region28
        $region27: #{tpu_custom_call.1} parent=11 // pred_region
          _
        $region28: #{tpu_custom_call.1} parent=11 // pred_fallthru
          _
        // Predicated region
        $region29: #{tpu_custom_call.1} parent=11 // pred_check
          %p254 = pneg %p180
        $region30: #{tpu_custom_call.1} parent=11 // pred_check_branch
          %256 = sbr.rel (%p254) target = $region32
        $region31: #{tpu_custom_call.1} parent=11 // pred_region
          _
        $region32: #{tpu_custom_call.1} parent=11 // pred_fallthru
          _
        // Predicated region
        $region33: #{tpu_custom_call.1} parent=11 // pred_check
          %p257 = pneg %p201
        $region34: #{tpu_custom_call.1} parent=11 // pred_check_branch
          %259 = sbr.rel (%p257) target = $region36
        $region35: #{tpu_custom_call.1} parent=11 // pred_region
          _
        $region36: #{tpu_custom_call.1} parent=11 // pred_fallthru
          _
      $region12: #{tpu_custom_call.1} parent=5 // pred_fallthru
        _
      %p260 = scmp.lt.s32.totalorder %s23, 2
      // Predicated region
      $region37: #{tpu_custom_call.1} parent=5 // pred_check
        %p261 = pneg %p260
      $region38: #{tpu_custom_call.1} parent=5 // pred_check_branch
        %263 = sbr.rel (%p261) target = $region40
      $region39: #{tpu_custom_call.1} parent=5 // pred_region
        // Predicated region
        $region41: #{tpu_custom_call.1} parent=39 // pred_check
          %p264 = pneg %p43
        $region42: #{tpu_custom_call.1} parent=39 // pred_check_branch
          %266 = sbr.rel (%p264) target = $region44
        $region43: #{tpu_custom_call.1} parent=39 // pred_region
          %s267 = sand.u32 %s33, 1
          %s268 = scalar_lea.sflag [#allocation3], %s267
          %s269 = sand.u32 %s33, 1
          %s270 = smul.addr %s269, 64
          %s271 = scalar_lea.vmem [#allocation2], %s270
          %273 = vsyncadd %s268, 0
          %s274 = smul.addr %s23, 8
          %s275 = smul.addr %s274, 8
          %s276 = scalar_lea.hbm %s0, %s275
          %s277 = sshll.u32 %s276, 4
          %s278 = int_to_ptr.hbm [resolvable:$true] %s277
          %s279 = sshll.u32 %s271, 4
          %s280 = int_to_ptr.vmem [resolvable:$true] %s279
          %285 = dma.hbm_to_vmem [thread:$0]  %s278, 1024, %s280, %s268, 128, 128, 8
        $region44: #{tpu_custom_call.1} parent=39 // pred_fallthru
          _
        // Predicated region
        $region45: #{tpu_custom_call.1} parent=39 // pred_check
          %p286 = pneg %p69
        $region46: #{tpu_custom_call.1} parent=39 // pred_check_branch
          %288 = sbr.rel (%p286) target = $region48
        $region47: #{tpu_custom_call.1} parent=39 // pred_region
          %s289 = sand.u32 %s59, 1
          %s290 = scalar_lea.sflag [#allocation6], %s289
          %s291 = sand.u32 %s59, 1
          %s292 = smul.addr %s291, 64
          %s293 = scalar_lea.vmem [#allocation5], %s292
          %295 = vsyncadd %s290, 0
          %s296 = smul.addr %s23, 8
          %s297 = smul.addr %s296, 8
          %s298 = scalar_lea.hbm %s1, %s297
          %s299 = sshll.u32 %s298, 4
          %s300 = int_to_ptr.hbm [resolvable:$true] %s299
          %s301 = sshll.u32 %s293, 4
          %s302 = int_to_ptr.vmem [resolvable:$true] %s301
          %307 = dma.hbm_to_vmem [thread:$0]  %s300, 1024, %s302, %s290, 128, 128, 8
        $region48: #{tpu_custom_call.1} parent=39 // pred_fallthru
          _
      $region40: #{tpu_custom_call.1} parent=5 // pred_fallthru
        _
      %p308 = scmp.le.s32.totalorder 1, %s23
      %p309 = scmp.lt.s32.totalorder %s23, 3
      %p310 = pnand %p308, %p309
      %p311 = pneg %p310
      // Predicated region
      $region49: #{tpu_custom_call.1} parent=5 // pred_check
        _
      $region50: #{tpu_custom_call.1} parent=5 // pred_check_branch
        %313 = sbr.rel (%p310) target = $region52
      $region51: #{tpu_custom_call.1} parent=5 // pred_region
        %s314 = ssub.s32 %s23, 1
        %s315 = sand.u32 %s36, 1
        %s316 = scalar_lea.sflag [#allocation3], %s315
        %s317 = sand.u32 %s36, 1
        %s318 = smul.addr %s317, 64
        %s319 = scalar_lea.vmem [#allocation2], %s318
        // Predicated region
        $region53: #{tpu_custom_call.1} parent=51 // pred_check
          %p320 = pneg %p49
        $region54: #{tpu_custom_call.1} parent=51 // pred_check_branch
          %322 = sbr.rel (%p320) target = $region56
        $region55: #{tpu_custom_call.1} parent=51 // pred_region
          %324 = dma.done %s316, 1024
        $region56: #{tpu_custom_call.1} parent=51 // pred_fallthru
          _
        %s325 = sand.u32 %s62, 1
        %s326 = scalar_lea.sflag [#allocation6], %s325
        %s327 = sand.u32 %s62, 1
        %s328 = smul.addr %s327, 64
        %s329 = scalar_lea.vmem [#allocation5], %s328
        // Predicated region
        $region57: #{tpu_custom_call.1} parent=51 // pred_check
          %p330 = pneg %p75
        $region58: #{tpu_custom_call.1} parent=51 // pred_check_branch
          %332 = sbr.rel (%p330) target = $region60
        $region59: #{tpu_custom_call.1} parent=51 // pred_region
          %334 = dma.done %s326, 1024
        $region60: #{tpu_custom_call.1} parent=51 // pred_fallthru
          _
        %s335 = sand.u32 %s36, 1
        %s336 = scalar_lea.sflag [#allocation3], %s335
        %s337 = sand.u32 %s36, 1
        %s338 = smul.addr %s337, 64
        %s339 = scalar_lea.vmem [#allocation2], %s338
        %p340 = pneg %p49
        %p341 = pneg %p46
        %s342 = sand.u32 %s62, 1
        %s343 = scalar_lea.sflag [#allocation6], %s342
        %s344 = sand.u32 %s62, 1
        %s345 = smul.addr %s344, 64
        %s346 = scalar_lea.vmem [#allocation5], %s345
        %p347 = pneg %p75
        %p348 = pneg %p72
        %p349 = pneg %p96
        %p350 = pneg %p93
        %p351 = pneg %p117
        %p352 = pneg %p114
        %p353 = pneg %p138
        %p354 = pneg %p135
        %p355 = pneg %p159
        %p356 = pneg %p156
        %p357 = pneg %p180
        %p358 = pneg %p177
        %p359 = pneg %p201
        %p360 = pneg %p198
        %p361 = pneg %p227
        %p362 = pneg %p224
        %s363 = sand.u32 %s214, 1
        %s364 = scalar_lea.sflag [#allocation4], %s363
        %s365 = sand.u32 %s214, 1
        %s366 = smul.addr %s365, 4
        %s367 = scalar_lea.vmem [#allocation7], %s366
        %v368 = vld [vmem:[%s319] sm:$0xff]
        %v369 = vld [vmem:[%s319 + $0x8] sm:$0xff]
        %v370 = vld [vmem:[%s329] sm:$0xff]
        %v371 = vld [vmem:[%s329 + $0x8] sm:$0xff]
        %v372 = vsub.f32 %v368, %v370
        %v373 = vsub.f32 %v369, %v371
        %s374 = scalar_lea.vmem %s319, 16 [#allocation2]
        %v375 = vld [vmem:[%s374] sm:$0xff]
        %v376 = vld [vmem:[%s374 + $0x8] sm:$0xff]
        %s377 = scalar_lea.vmem %s329, 16 [#allocation5]
        %v378 = vld [vmem:[%s377] sm:$0xff]
        %v379 = vld [vmem:[%s377 + $0x8] sm:$0xff]
        %v380 = vsub.f32 %v375, %v378
        %v381 = vsub.f32 %v376, %v379
        %v382 = vadd.f32 %v372, %v380
        %v383 = vadd.f32 %v373, %v381
        %s384 = scalar_lea.vmem %s319, 32 [#allocation2]
        %v385 = vld [vmem:[%s384] sm:$0xff]
        %v386 = vld [vmem:[%s384 + $0x8] sm:$0xff]
        %s387 = scalar_lea.vmem %s329, 32 [#allocation5]
        %v388 = vld [vmem:[%s387] sm:$0xff]
        %v389 = vld [vmem:[%s387 + $0x8] sm:$0xff]
        %v390 = vsub.f32 %v385, %v388
        %v391 = vsub.f32 %v386, %v389
        %v392 = vadd.f32 %v382, %v390
        %v393 = vadd.f32 %v383, %v391
        %s394 = scalar_lea.vmem %s319, 48 [#allocation2]
        %v395 = vld [vmem:[%s394] sm:$0xff]
        %v396 = vld [vmem:[%s394 + $0x8] sm:$0xff]
        %s397 = scalar_lea.vmem %s329, 48 [#allocation5]
        %v398 = vld [vmem:[%s397] sm:$0xff]
        %v399 = vld [vmem:[%s397 + $0x8] sm:$0xff]
        %v400 = vsub.f32 %v395, %v398
        %v401 = vsub.f32 %v396, %v399
        %v402 = vadd.f32 %v392, %v400
        %v403 = vadd.f32 %v393, %v401
        %v404 = vmul.f32 %v402, 0.25
        %v405 = vmul.f32 %v403, 0.25
        %v406 = vld [vmem:[%s2] sm:$0xff]
        %v407 = vld [vmem:[%s2 + $0x8] sm:$0xff]
        %vm408 = vcmask 130048
        %v410 = vsel %vm408, %v404, 0
        %v413 = vsel %vm408, %v405, 0
        %415 = vmatpush.msra.mxu0 0.0
        %416 = vmatpush.msra.mxu0 0.0
        %417 = vmatpush.msra.mxu0 0.0
        %418 = vmatpush.msra.mxu0 0.0
        %419 = vmatpush.msra.mxu0 0.0
        %420 = vmatpush.msra.mxu0 0.0
        %421 = vmatpush.msra.mxu0 0.0
        %422 = vmatpush.msra.mxu0 0.0
        %423 = vmatpush.msra.mxu0 0.0
        %424 = vmatpush.msra.mxu0 0.0
        %425 = vmatpush.msra.mxu0 0.0
        %426 = vmatpush.msra.mxu0 0.0
        %427 = vmatpush.msra.mxu0 0.0
        %428 = vmatpush.msra.mxu0 0.0
        %v429 = vand.u32 %v407, 4294901760
        %430 = vmatpush.msra.mxu0 %v429
        %v431 = vand.u32 %v406, 4294901760
        %432 = vmatpush.msra.mxu0 %v431
        %v433 = vand.u32 %v410, 4294901760
        %v434 = vsub.f32 %v410, %v433
        %v435 = vand.u32 %v434, 4294901760
        %v436 = vsub.f32 %v434, %v435
        %v437 = vand.u32 %v436, 4294901760
        %438 = vmatmul.f32.gmra.mxu0 %v437
        %v439 = vpop.f32.mrf.mxu0
        %v440 = vadd.f32 0.0, %v439
        %v441 = vand.u32 %v413, 4294901760
        %v442 = vsub.f32 %v413, %v441
        %v443 = vand.u32 %v442, 4294901760
        %v444 = vsub.f32 %v442, %v443
        %v445 = vand.u32 %v444, 4294901760
        %446 = vmatmul.f32.gmra.mxu0 %v445
        %v447 = vpop.f32.mrf.mxu0
        %v448 = vadd.f32 0.0, %v447
        %449 = vdwg.mxu0
        %450 = vmatpush.msra.mxu0 0.0
        %451 = vmatpush.msra.mxu0 0.0
        %452 = vmatpush.msra.mxu0 0.0
        %453 = vmatpush.msra.mxu0 0.0
        %454 = vmatpush.msra.mxu0 0.0
        %455 = vmatpush.msra.mxu0 0.0
        %456 = vmatpush.msra.mxu0 0.0
        %457 = vmatpush.msra.mxu0 0.0
        %458 = vmatpush.msra.mxu0 0.0
        %459 = vmatpush.msra.mxu0 0.0
        %460 = vmatpush.msra.mxu0 0.0
        %461 = vmatpush.msra.mxu0 0.0
        %462 = vmatpush.msra.mxu0 0.0
        %463 = vmatpush.msra.mxu0 0.0
        %v464 = vand.u32 %v407, 4294901760
        %v465 = vsub.f32 %v407, %v464
        %v466 = vand.u32 %v465, 4294901760
        %v467 = vsub.f32 %v465, %v466
        %v468 = vand.u32 %v467, 4294901760
        %469 = vmatpush.msra.mxu0 %v468
        %v470 = vand.u32 %v406, 4294901760
        %v471 = vsub.f32 %v406, %v470
        %v472 = vand.u32 %v471, 4294901760
        %v473 = vsub.f32 %v471, %v472
        %v474 = vand.u32 %v473, 4294901760
        %475 = vmatpush.msra.mxu0 %v474
        %v476 = vand.u32 %v410, 4294901760
        %477 = vmatmul.f32.gmra.mxu0 %v476
        %v478 = vpop.f32.mrf.mxu0
        %v479 = vadd.f32 %v440, %v478
        %v480 = vand.u32 %v413, 4294901760
        %481 = vmatmul.f32.gmra.mxu0 %v480
        %v482 = vpop.f32.mrf.mxu0
        %v483 = vadd.f32 %v448, %v482
        %484 = vdwg.mxu0
        %485 = vmatpush.msra.mxu0 0.0
        %486 = vmatpush.msra.mxu0 0.0
        %487 = vmatpush.msra.mxu0 0.0
        %488 = vmatpush.msra.mxu0 0.0
        %489 = vmatpush.msra.mxu0 0.0
        %490 = vmatpush.msra.mxu0 0.0
        %491 = vmatpush.msra.mxu0 0.0
        %492 = vmatpush.msra.mxu0 0.0
        %493 = vmatpush.msra.mxu0 0.0
        %494 = vmatpush.msra.mxu0 0.0
        %495 = vmatpush.msra.mxu0 0.0
        %496 = vmatpush.msra.mxu0 0.0
        %497 = vmatpush.msra.mxu0 0.0
        %498 = vmatpush.msra.mxu0 0.0
        %v499 = vand.u32 %v407, 4294901760
        %v500 = vsub.f32 %v407, %v499
        %501 = vmatpush.msra.mxu0 %v500
        %v502 = vand.u32 %v406, 4294901760
        %v503 = vsub.f32 %v406, %v502
        %504 = vmatpush.msra.mxu0 %v503
        %v505 = vand.u32 %v410, 4294901760
        %v506 = vsub.f32 %v410, %v505
        %507 = vmatmul.f32.gmra.mxu0 %v506
        %v508 = vpop.f32.mrf.mxu0
        %v509 = vadd.f32 %v479, %v508
        %v510 = vand.u32 %v413, 4294901760
        %v511 = vsub.f32 %v413, %v510
        %512 = vmatmul.f32.gmra.mxu0 %v511
        %v513 = vpop.f32.mrf.mxu0
        %v514 = vadd.f32 %v483, %v513
        %515 = vdwg.mxu0
        %516 = vmatpush.msra.mxu0 0.0
        %517 = vmatpush.msra.mxu0 0.0
        %518 = vmatpush.msra.mxu0 0.0
        %519 = vmatpush.msra.mxu0 0.0
        %520 = vmatpush.msra.mxu0 0.0
        %521 = vmatpush.msra.mxu0 0.0
        %522 = vmatpush.msra.mxu0 0.0
        %523 = vmatpush.msra.mxu0 0.0
        %524 = vmatpush.msra.mxu0 0.0
        %525 = vmatpush.msra.mxu0 0.0
        %526 = vmatpush.msra.mxu0 0.0
        %527 = vmatpush.msra.mxu0 0.0
        %528 = vmatpush.msra.mxu0 0.0
        %529 = vmatpush.msra.mxu0 0.0
        %v530 = vand.u32 %v407, 4294901760
        %531 = vmatpush.msra.mxu0 %v530
        %v532 = vand.u32 %v406, 4294901760
        %533 = vmatpush.msra.mxu0 %v532
        %v534 = vand.u32 %v410, 4294901760
        %v535 = vsub.f32 %v410, %v534
        %v536 = vand.u32 %v535, 4294901760
        %537 = vmatmul.f32.gmra.mxu0 %v536
        %v538 = vpop.f32.mrf.mxu0
        %v539 = vadd.f32 %v509, %v538
        %v540 = vand.u32 %v413, 4294901760
        %v541 = vsub.f32 %v413, %v540
        %v542 = vand.u32 %v541, 4294901760
        %543 = vmatmul.f32.gmra.mxu0 %v542
        %v544 = vpop.f32.mrf.mxu0
        %v545 = vadd.f32 %v514, %v544
        %546 = vdwg.mxu0
        %547 = vmatpush.msra.mxu0 0.0
        %548 = vmatpush.msra.mxu0 0.0
        %549 = vmatpush.msra.mxu0 0.0
        %550 = vmatpush.msra.mxu0 0.0
        %551 = vmatpush.msra.mxu0 0.0
        %552 = vmatpush.msra.mxu0 0.0
        %553 = vmatpush.msra.mxu0 0.0
        %554 = vmatpush.msra.mxu0 0.0
        %555 = vmatpush.msra.mxu0 0.0
        %556 = vmatpush.msra.mxu0 0.0
        %557 = vmatpush.msra.mxu0 0.0
        %558 = vmatpush.msra.mxu0 0.0
        %559 = vmatpush.msra.mxu0 0.0
        %560 = vmatpush.msra.mxu0 0.0
        %v561 = vand.u32 %v407, 4294901760
        %v562 = vsub.f32 %v407, %v561
        %v563 = vand.u32 %v562, 4294901760
        %564 = vmatpush.msra.mxu0 %v563
        %v565 = vand.u32 %v406, 4294901760
        %v566 = vsub.f32 %v406, %v565
        %v567 = vand.u32 %v566, 4294901760
        %568 = vmatpush.msra.mxu0 %v567
        %v569 = vand.u32 %v410, 4294901760
        %570 = vmatmul.f32.gmra.mxu0 %v569
        %v571 = vpop.f32.mrf.mxu0
        %v572 = vadd.f32 %v539, %v571
        %v573 = vand.u32 %v413, 4294901760
        %574 = vmatmul.f32.gmra.mxu0 %v573
        %v575 = vpop.f32.mrf.mxu0
        %v576 = vadd.f32 %v545, %v575
        %577 = vdwg.mxu0
        %578 = vmatpush.msra.mxu0 0.0
        %579 = vmatpush.msra.mxu0 0.0
        %580 = vmatpush.msra.mxu0 0.0
        %581 = vmatpush.msra.mxu0 0.0
        %582 = vmatpush.msra.mxu0 0.0
        %583 = vmatpush.msra.mxu0 0.0
        %584 = vmatpush.msra.mxu0 0.0
        %585 = vmatpush.msra.mxu0 0.0
        %586 = vmatpush.msra.mxu0 0.0
        %587 = vmatpush.msra.mxu0 0.0
        %588 = vmatpush.msra.mxu0 0.0
        %589 = vmatpush.msra.mxu0 0.0
        %590 = vmatpush.msra.mxu0 0.0
        %591 = vmatpush.msra.mxu0 0.0
        %v592 = vand.u32 %v407, 4294901760
        %593 = vmatpush.msra.mxu0 %v592
        %v594 = vand.u32 %v406, 4294901760
        %595 = vmatpush.msra.mxu0 %v594
        %v596 = vand.u32 %v410, 4294901760
        %597 = vmatmul.f32.gmra.mxu0 %v596
        %v598 = vpop.f32.mrf.mxu0
        %v599 = vadd.f32 %v572, %v598
        %v600 = vand.u32 %v413, 4294901760
        %601 = vmatmul.f32.gmra.mxu0 %v600
        %v602 = vpop.f32.mrf.mxu0
        %v603 = vadd.f32 %v576, %v602
        %604 = vdwg.mxu0
        %v605 = vld [vmem:[%s3] sm:$0xff]
        %v606 = vld [vmem:[%s3 + $0x8] sm:$0xff]
        %607 = vmatpush.msra.mxu0 0.0
        %608 = vmatpush.msra.mxu0 0.0
        %609 = vmatpush.msra.mxu0 0.0
        %610 = vmatpush.msra.mxu0 0.0
        %611 = vmatpush.msra.mxu0 0.0
        %612 = vmatpush.msra.mxu0 0.0
        %613 = vmatpush.msra.mxu0 0.0
        %614 = vmatpush.msra.mxu0 0.0
        %615 = vmatpush.msra.mxu0 0.0
        %616 = vmatpush.msra.mxu0 0.0
        %617 = vmatpush.msra.mxu0 0.0
        %618 = vmatpush.msra.mxu0 0.0
        %619 = vmatpush.msra.mxu0 0.0
        %620 = vmatpush.msra.mxu0 0.0
        %v621 = vand.u32 %v606, 4294901760
        %622 = vmatpush.msra.mxu0 %v621
        %v623 = vand.u32 %v605, 4294901760
        %624 = vmatpush.msra.mxu0 %v623
        %v625 = vand.u32 %v410, 4294901760
        %v626 = vsub.f32 %v410, %v625
        %v627 = vand.u32 %v626, 4294901760
        %v628 = vsub.f32 %v626, %v627
        %v629 = vand.u32 %v628, 4294901760
        %630 = vmatmul.f32.gmra.mxu0 %v629
        %v631 = vpop.f32.mrf.mxu0
        %v632 = vadd.f32 0.0, %v631
        %v633 = vand.u32 %v413, 4294901760
        %v634 = vsub.f32 %v413, %v633
        %v635 = vand.u32 %v634, 4294901760
        %v636 = vsub.f32 %v634, %v635
        %v637 = vand.u32 %v636, 4294901760
        %638 = vmatmul.f32.gmra.mxu0 %v637
        %v639 = vpop.f32.mrf.mxu0
        %v640 = vadd.f32 0.0, %v639
        %641 = vdwg.mxu0
        %642 = vmatpush.msra.mxu0 0.0
        %643 = vmatpush.msra.mxu0 0.0
        %644 = vmatpush.msra.mxu0 0.0
        %645 = vmatpush.msra.mxu0 0.0
        %646 = vmatpush.msra.mxu0 0.0
        %647 = vmatpush.msra.mxu0 0.0
        %648 = vmatpush.msra.mxu0 0.0
        %649 = vmatpush.msra.mxu0 0.0
        %650 = vmatpush.msra.mxu0 0.0
        %651 = vmatpush.msra.mxu0 0.0
        %652 = vmatpush.msra.mxu0 0.0
        %653 = vmatpush.msra.mxu0 0.0
        %654 = vmatpush.msra.mxu0 0.0
        %655 = vmatpush.msra.mxu0 0.0
        %v656 = vand.u32 %v606, 4294901760
        %v657 = vsub.f32 %v606, %v656
        %v658 = vand.u32 %v657, 4294901760
        %v659 = vsub.f32 %v657, %v658
        %v660 = vand.u32 %v659, 4294901760
        %661 = vmatpush.msra.mxu0 %v660
        %v662 = vand.u32 %v605, 4294901760
        %v663 = vsub.f32 %v605, %v662
        %v664 = vand.u32 %v663, 4294901760
        %v665 = vsub.f32 %v663, %v664
        %v666 = vand.u32 %v665, 4294901760
        %667 = vmatpush.msra.mxu0 %v666
        %v668 = vand.u32 %v410, 4294901760
        %669 = vmatmul.f32.gmra.mxu0 %v668
        %v670 = vpop.f32.mrf.mxu0
        %v671 = vadd.f32 %v632, %v670
        %v672 = vand.u32 %v413, 4294901760
        %673 = vmatmul.f32.gmra.mxu0 %v672
        %v674 = vpop.f32.mrf.mxu0
        %v675 = vadd.f32 %v640, %v674
        %676 = vdwg.mxu0
        %677 = vmatpush.msra.mxu0 0.0
        %678 = vmatpush.msra.mxu0 0.0
        %679 = vmatpush.msra.mxu0 0.0
        %680 = vmatpush.msra.mxu0 0.0
        %681 = vmatpush.msra.mxu0 0.0
        %682 = vmatpush.msra.mxu0 0.0
        %683 = vmatpush.msra.mxu0 0.0
        %684 = vmatpush.msra.mxu0 0.0
        %685 = vmatpush.msra.mxu0 0.0
        %686 = vmatpush.msra.mxu0 0.0
        %687 = vmatpush.msra.mxu0 0.0
        %688 = vmatpush.msra.mxu0 0.0
        %689 = vmatpush.msra.mxu0 0.0
        %690 = vmatpush.msra.mxu0 0.0
        %v691 = vand.u32 %v606, 4294901760
        %v692 = vsub.f32 %v606, %v691
        %693 = vmatpush.msra.mxu0 %v692
        %v694 = vand.u32 %v605, 4294901760
        %v695 = vsub.f32 %v605, %v694
        %696 = vmatpush.msra.mxu0 %v695
        %v697 = vand.u32 %v410, 4294901760
        %v698 = vsub.f32 %v410, %v697
        %699 = vmatmul.f32.gmra.mxu0 %v698
        %v700 = vpop.f32.mrf.mxu0
        %v701 = vadd.f32 %v671, %v700
        %v702 = vand.u32 %v413, 4294901760
        %v703 = vsub.f32 %v413, %v702
        %704 = vmatmul.f32.gmra.mxu0 %v703
        %v705 = vpop.f32.mrf.mxu0
        %v706 = vadd.f32 %v675, %v705
        %707 = vdwg.mxu0
        %708 = vmatpush.msra.mxu0 0.0
        %709 = vmatpush.msra.mxu0 0.0
        %710 = vmatpush.msra.mxu0 0.0
        %711 = vmatpush.msra.mxu0 0.0
        %712 = vmatpush.msra.mxu0 0.0
        %713 = vmatpush.msra.mxu0 0.0
        %714 = vmatpush.msra.mxu0 0.0
        %715 = vmatpush.msra.mxu0 0.0
        %716 = vmatpush.msra.mxu0 0.0
        %717 = vmatpush.msra.mxu0 0.0
        %718 = vmatpush.msra.mxu0 0.0
        %719 = vmatpush.msra.mxu0 0.0
        %720 = vmatpush.msra.mxu0 0.0
        %721 = vmatpush.msra.mxu0 0.0
        %v722 = vand.u32 %v606, 4294901760
        %723 = vmatpush.msra.mxu0 %v722
        %v724 = vand.u32 %v605, 4294901760
        %725 = vmatpush.msra.mxu0 %v724
        %v726 = vand.u32 %v410, 4294901760
        %v727 = vsub.f32 %v410, %v726
        %v728 = vand.u32 %v727, 4294901760
        %729 = vmatmul.f32.gmra.mxu0 %v728
        %v730 = vpop.f32.mrf.mxu0
        %v731 = vadd.f32 %v701, %v730
        %v732 = vand.u32 %v413, 4294901760
        %v733 = vsub.f32 %v413, %v732
        %v734 = vand.u32 %v733, 4294901760
        %735 = vmatmul.f32.gmra.mxu0 %v734
        %v736 = vpop.f32.mrf.mxu0
        %v737 = vadd.f32 %v706, %v736
        %738 = vdwg.mxu0
        %739 = vmatpush.msra.mxu0 0.0
        %740 = vmatpush.msra.mxu0 0.0
        %741 = vmatpush.msra.mxu0 0.0
        %742 = vmatpush.msra.mxu0 0.0
        %743 = vmatpush.msra.mxu0 0.0
        %744 = vmatpush.msra.mxu0 0.0
        %745 = vmatpush.msra.mxu0 0.0
        %746 = vmatpush.msra.mxu0 0.0
        %747 = vmatpush.msra.mxu0 0.0
        %748 = vmatpush.msra.mxu0 0.0
        %749 = vmatpush.msra.mxu0 0.0
        %750 = vmatpush.msra.mxu0 0.0
        %751 = vmatpush.msra.mxu0 0.0
        %752 = vmatpush.msra.mxu0 0.0
        %v753 = vand.u32 %v606, 4294901760
        %v754 = vsub.f32 %v606, %v753
        %v755 = vand.u32 %v754, 4294901760
        %756 = vmatpush.msra.mxu0 %v755
        %v757 = vand.u32 %v605, 4294901760
        %v758 = vsub.f32 %v605, %v757
        %v759 = vand.u32 %v758, 4294901760
        %760 = vmatpush.msra.mxu0 %v759
        %v761 = vand.u32 %v410, 4294901760
        %762 = vmatmul.f32.gmra.mxu0 %v761
        %v763 = vpop.f32.mrf.mxu0
        %v764 = vadd.f32 %v731, %v763
        %v765 = vand.u32 %v413, 4294901760
        %766 = vmatmul.f32.gmra.mxu0 %v765
        %v767 = vpop.f32.mrf.mxu0
        %v768 = vadd.f32 %v737, %v767
        %769 = vdwg.mxu0
        %770 = vmatpush.msra.mxu0 0.0
        %771 = vmatpush.msra.mxu0 0.0
        %772 = vmatpush.msra.mxu0 0.0
        %773 = vmatpush.msra.mxu0 0.0
        %774 = vmatpush.msra.mxu0 0.0
        %775 = vmatpush.msra.mxu0 0.0
        %776 = vmatpush.msra.mxu0 0.0
        %777 = vmatpush.msra.mxu0 0.0
        %778 = vmatpush.msra.mxu0 0.0
        %779 = vmatpush.msra.mxu0 0.0
        %780 = vmatpush.msra.mxu0 0.0
        %781 = vmatpush.msra.mxu0 0.0
        %782 = vmatpush.msra.mxu0 0.0
        %783 = vmatpush.msra.mxu0 0.0
        %v784 = vand.u32 %v606, 4294901760
        %785 = vmatpush.msra.mxu0 %v784
        %v786 = vand.u32 %v605, 4294901760
        %787 = vmatpush.msra.mxu0 %v786
        %v788 = vand.u32 %v410, 4294901760
        %789 = vmatmul.f32.gmra.mxu0 %v788
        %v790 = vpop.f32.mrf.mxu0
        %v791 = vadd.f32 %v764, %v790
        %v792 = vand.u32 %v413, 4294901760
        %793 = vmatmul.f32.gmra.mxu0 %v792
        %v794 = vpop.f32.mrf.mxu0
        %v795 = vadd.f32 %v768, %v794
        %796 = vdwg.mxu0
        %v797 = vld [vmem:[%s4] sm:$0xff]
        %v798 = vld [vmem:[%s4 + $0x8] sm:$0xff]
        %799 = vmatpush.msra.mxu0 0.0
        %800 = vmatpush.msra.mxu0 0.0
        %801 = vmatpush.msra.mxu0 0.0
        %802 = vmatpush.msra.mxu0 0.0
        %803 = vmatpush.msra.mxu0 0.0
        %804 = vmatpush.msra.mxu0 0.0
        %805 = vmatpush.msra.mxu0 0.0
        %806 = vmatpush.msra.mxu0 0.0
        %807 = vmatpush.msra.mxu0 0.0
        %808 = vmatpush.msra.mxu0 0.0
        %809 = vmatpush.msra.mxu0 0.0
        %810 = vmatpush.msra.mxu0 0.0
        %811 = vmatpush.msra.mxu0 0.0
        %812 = vmatpush.msra.mxu0 0.0
        %v813 = vand.u32 %v798, 4294901760
        %814 = vmatpush.msra.mxu0 %v813
        %v815 = vand.u32 %v797, 4294901760
        %816 = vmatpush.msra.mxu0 %v815
        %v817 = vand.u32 %v410, 4294901760
        %v818 = vsub.f32 %v410, %v817
        %v819 = vand.u32 %v818, 4294901760
        %v820 = vsub.f32 %v818, %v819
        %v821 = vand.u32 %v820, 4294901760
        %822 = vmatmul.f32.gmra.mxu0 %v821
        %v823 = vpop.f32.mrf.mxu0
        %v824 = vadd.f32 0.0, %v823
        %v825 = vand.u32 %v413, 4294901760
        %v826 = vsub.f32 %v413, %v825
        %v827 = vand.u32 %v826, 4294901760
        %v828 = vsub.f32 %v826, %v827
        %v829 = vand.u32 %v828, 4294901760
        %830 = vmatmul.f32.gmra.mxu0 %v829
        %v831 = vpop.f32.mrf.mxu0
        %v832 = vadd.f32 0.0, %v831
        %833 = vdwg.mxu0
        %834 = vmatpush.msra.mxu0 0.0
        %835 = vmatpush.msra.mxu0 0.0
        %836 = vmatpush.msra.mxu0 0.0
        %837 = vmatpush.msra.mxu0 0.0
        %838 = vmatpush.msra.mxu0 0.0
        %839 = vmatpush.msra.mxu0 0.0
        %840 = vmatpush.msra.mxu0 0.0
        %841 = vmatpush.msra.mxu0 0.0
        %842 = vmatpush.msra.mxu0 0.0
        %843 = vmatpush.msra.mxu0 0.0
        %844 = vmatpush.msra.mxu0 0.0
        %845 = vmatpush.msra.mxu0 0.0
        %846 = vmatpush.msra.mxu0 0.0
        %847 = vmatpush.msra.mxu0 0.0
        %v848 = vand.u32 %v798, 4294901760
        %v849 = vsub.f32 %v798, %v848
        %v850 = vand.u32 %v849, 4294901760
        %v851 = vsub.f32 %v849, %v850
        %v852 = vand.u32 %v851, 4294901760
        %853 = vmatpush.msra.mxu0 %v852
        %v854 = vand.u32 %v797, 4294901760
        %v855 = vsub.f32 %v797, %v854
        %v856 = vand.u32 %v855, 4294901760
        %v857 = vsub.f32 %v855, %v856
        %v858 = vand.u32 %v857, 4294901760
        %859 = vmatpush.msra.mxu0 %v858
        %v860 = vand.u32 %v410, 4294901760
        %861 = vmatmul.f32.gmra.mxu0 %v860
        %v862 = vpop.f32.mrf.mxu0
        %v863 = vadd.f32 %v824, %v862
        %v864 = vand.u32 %v413, 4294901760
        %865 = vmatmul.f32.gmra.mxu0 %v864
        %v866 = vpop.f32.mrf.mxu0
        %v867 = vadd.f32 %v832, %v866
        %868 = vdwg.mxu0
        %869 = vmatpush.msra.mxu0 0.0
        %870 = vmatpush.msra.mxu0 0.0
        %871 = vmatpush.msra.mxu0 0.0
        %872 = vmatpush.msra.mxu0 0.0
        %873 = vmatpush.msra.mxu0 0.0
        %874 = vmatpush.msra.mxu0 0.0
        %875 = vmatpush.msra.mxu0 0.0
        %876 = vmatpush.msra.mxu0 0.0
        %877 = vmatpush.msra.mxu0 0.0
        %878 = vmatpush.msra.mxu0 0.0
        %879 = vmatpush.msra.mxu0 0.0
        %880 = vmatpush.msra.mxu0 0.0
        %881 = vmatpush.msra.mxu0 0.0
        %882 = vmatpush.msra.mxu0 0.0
        %v883 = vand.u32 %v798, 4294901760
        %v884 = vsub.f32 %v798, %v883
        %885 = vmatpush.msra.mxu0 %v884
        %v886 = vand.u32 %v797, 4294901760
        %v887 = vsub.f32 %v797, %v886
        %888 = vmatpush.msra.mxu0 %v887
        %v889 = vand.u32 %v410, 4294901760
        %v890 = vsub.f32 %v410, %v889
        %891 = vmatmul.f32.gmra.mxu0 %v890
        %v892 = vpop.f32.mrf.mxu0
        %v893 = vadd.f32 %v863, %v892
        %v894 = vand.u32 %v413, 4294901760
        %v895 = vsub.f32 %v413, %v894
        %896 = vmatmul.f32.gmra.mxu0 %v895
        %v897 = vpop.f32.mrf.mxu0
        %v898 = vadd.f32 %v867, %v897
        %899 = vdwg.mxu0
        %900 = vmatpush.msra.mxu0 0.0
        %901 = vmatpush.msra.mxu0 0.0
        %902 = vmatpush.msra.mxu0 0.0
        %903 = vmatpush.msra.mxu0 0.0
        %904 = vmatpush.msra.mxu0 0.0
        %905 = vmatpush.msra.mxu0 0.0
        %906 = vmatpush.msra.mxu0 0.0
        %907 = vmatpush.msra.mxu0 0.0
        %908 = vmatpush.msra.mxu0 0.0
        %909 = vmatpush.msra.mxu0 0.0
        %910 = vmatpush.msra.mxu0 0.0
        %911 = vmatpush.msra.mxu0 0.0
        %912 = vmatpush.msra.mxu0 0.0
        %913 = vmatpush.msra.mxu0 0.0
        %v914 = vand.u32 %v798, 4294901760
        %915 = vmatpush.msra.mxu0 %v914
        %v916 = vand.u32 %v797, 4294901760
        %917 = vmatpush.msra.mxu0 %v916
        %v918 = vand.u32 %v410, 4294901760
        %v919 = vsub.f32 %v410, %v918
        %v920 = vand.u32 %v919, 4294901760
        %921 = vmatmul.f32.gmra.mxu0 %v920
        %v922 = vpop.f32.mrf.mxu0
        %v923 = vadd.f32 %v893, %v922
        %v924 = vand.u32 %v413, 4294901760
        %v925 = vsub.f32 %v413, %v924
        %v926 = vand.u32 %v925, 4294901760
        %927 = vmatmul.f32.gmra.mxu0 %v926
        %v928 = vpop.f32.mrf.mxu0
        %v929 = vadd.f32 %v898, %v928
        %930 = vdwg.mxu0
        %931 = vmatpush.msra.mxu0 0.0
        %932 = vmatpush.msra.mxu0 0.0
        %933 = vmatpush.msra.mxu0 0.0
        %934 = vmatpush.msra.mxu0 0.0
        %935 = vmatpush.msra.mxu0 0.0
        %936 = vmatpush.msra.mxu0 0.0
        %937 = vmatpush.msra.mxu0 0.0
        %938 = vmatpush.msra.mxu0 0.0
        %939 = vmatpush.msra.mxu0 0.0
        %940 = vmatpush.msra.mxu0 0.0
        %941 = vmatpush.msra.mxu0 0.0
        %942 = vmatpush.msra.mxu0 0.0
        %943 = vmatpush.msra.mxu0 0.0
        %944 = vmatpush.msra.mxu0 0.0
        %v945 = vand.u32 %v798, 4294901760
        %v946 = vsub.f32 %v798, %v945
        %v947 = vand.u32 %v946, 4294901760
        %948 = vmatpush.msra.mxu0 %v947
        %v949 = vand.u32 %v797, 4294901760
        %v950 = vsub.f32 %v797, %v949
        %v951 = vand.u32 %v950, 4294901760
        %952 = vmatpush.msra.mxu0 %v951
        %v953 = vand.u32 %v410, 4294901760
        %954 = vmatmul.f32.gmra.mxu0 %v953
        %v955 = vpop.f32.mrf.mxu0
        %v956 = vadd.f32 %v923, %v955
        %v957 = vand.u32 %v413, 4294901760
        %958 = vmatmul.f32.gmra.mxu0 %v957
        %v959 = vpop.f32.mrf.mxu0
        %v960 = vadd.f32 %v929, %v959
        %961 = vdwg.mxu0
        %962 = vmatpush.msra.mxu0 0.0
        %963 = vmatpush.msra.mxu0 0.0
        %964 = vmatpush.msra.mxu0 0.0
        %965 = vmatpush.msra.mxu0 0.0
        %966 = vmatpush.msra.mxu0 0.0
        %967 = vmatpush.msra.mxu0 0.0
        %968 = vmatpush.msra.mxu0 0.0
        %969 = vmatpush.msra.mxu0 0.0
        %970 = vmatpush.msra.mxu0 0.0
        %971 = vmatpush.msra.mxu0 0.0
        %972 = vmatpush.msra.mxu0 0.0
        %973 = vmatpush.msra.mxu0 0.0
        %974 = vmatpush.msra.mxu0 0.0
        %975 = vmatpush.msra.mxu0 0.0
        %v976 = vand.u32 %v798, 4294901760
        %977 = vmatpush.msra.mxu0 %v976
        %v978 = vand.u32 %v797, 4294901760
        %979 = vmatpush.msra.mxu0 %v978
        %v980 = vand.u32 %v410, 4294901760
        %981 = vmatmul.f32.gmra.mxu0 %v980
        %v982 = vpop.f32.mrf.mxu0
        %v983 = vadd.f32 %v956, %v982
        %v984 = vand.u32 %v413, 4294901760
        %985 = vmatmul.f32.gmra.mxu0 %v984
        %v986 = vpop.f32.mrf.mxu0
        %v987 = vadd.f32 %v960, %v986
        %988 = vdwg.mxu0
        %v989 = vld [vmem:[%s5] sm:$0xf]
        %v990 = vld [vmem:[%s6] sm:$0xf]
        %v991 = vld [vmem:[%s7] sm:$0xf]
        %v993 = vsel %vm408, %v989, 0
        %995 = vmatpush.msra.mxu0 0.0
        %996 = vmatpush.msra.mxu0 0.0
        %997 = vmatpush.msra.mxu0 0.0
        %998 = vmatpush.msra.mxu0 0.0
        %999 = vmatpush.msra.mxu0 0.0
        %1000 = vmatpush.msra.mxu0 0.0
        %1001 = vmatpush.msra.mxu0 0.0
        %1002 = vmatpush.msra.mxu0 0.0
        %1003 = vmatpush.msra.mxu0 0.0
        %1004 = vmatpush.msra.mxu0 0.0
        %1005 = vmatpush.msra.mxu0 0.0
        %1006 = vmatpush.msra.mxu0 0.0
        %1007 = vmatpush.msra.mxu0 0.0
        %1008 = vmatpush.msra.mxu0 0.0
        %v1009 = vand.u32 %v795, 4294901760
        %1010 = vmatpush.msra.mxu0 %v1009
        %v1011 = vand.u32 %v791, 4294901760
        %1012 = vmatpush.msra.mxu0 %v1011
        %v1013 = vand.u32 %v993, 4294901760
        %v1014 = vsub.f32 %v993, %v1013
        %v1015 = vand.u32 %v1014, 4294901760
        %v1016 = vsub.f32 %v1014, %v1015
        %v1017 = vand.u32 %v1016, 4294901760
        %1018 = vmatmul.f32.gmra.mxu0 %v1017
        %v1019 = vpop.f32.mrf.mxu0
        %v1020 = vadd.f32 0.0, %v1019
        %1021 = vdwg.mxu0
        %1022 = vmatpush.msra.mxu0 0.0
        %1023 = vmatpush.msra.mxu0 0.0
        %1024 = vmatpush.msra.mxu0 0.0
        %1025 = vmatpush.msra.mxu0 0.0
        %1026 = vmatpush.msra.mxu0 0.0
        %1027 = vmatpush.msra.mxu0 0.0
        %1028 = vmatpush.msra.mxu0 0.0
        %1029 = vmatpush.msra.mxu0 0.0
        %1030 = vmatpush.msra.mxu0 0.0
        %1031 = vmatpush.msra.mxu0 0.0
        %1032 = vmatpush.msra.mxu0 0.0
        %1033 = vmatpush.msra.mxu0 0.0
        %1034 = vmatpush.msra.mxu0 0.0
        %1035 = vmatpush.msra.mxu0 0.0
        %v1036 = vand.u32 %v795, 4294901760
        %v1037 = vsub.f32 %v795, %v1036
        %v1038 = vand.u32 %v1037, 4294901760
        %v1039 = vsub.f32 %v1037, %v1038
        %v1040 = vand.u32 %v1039, 4294901760
        %1041 = vmatpush.msra.mxu0 %v1040
        %v1042 = vand.u32 %v791, 4294901760
        %v1043 = vsub.f32 %v791, %v1042
        %v1044 = vand.u32 %v1043, 4294901760
        %v1045 = vsub.f32 %v1043, %v1044
        %v1046 = vand.u32 %v1045, 4294901760
        %1047 = vmatpush.msra.mxu0 %v1046
        %v1048 = vand.u32 %v993, 4294901760
        %1049 = vmatmul.f32.gmra.mxu0 %v1048
        %v1050 = vpop.f32.mrf.mxu0
        %v1051 = vadd.f32 %v1020, %v1050
        %1052 = vdwg.mxu0
        %1053 = vmatpush.msra.mxu0 0.0
        %1054 = vmatpush.msra.mxu0 0.0
        %1055 = vmatpush.msra.mxu0 0.0
        %1056 = vmatpush.msra.mxu0 0.0
        %1057 = vmatpush.msra.mxu0 0.0
        %1058 = vmatpush.msra.mxu0 0.0
        %1059 = vmatpush.msra.mxu0 0.0
        %1060 = vmatpush.msra.mxu0 0.0
        %1061 = vmatpush.msra.mxu0 0.0
        %1062 = vmatpush.msra.mxu0 0.0
        %1063 = vmatpush.msra.mxu0 0.0
        %1064 = vmatpush.msra.mxu0 0.0
        %1065 = vmatpush.msra.mxu0 0.0
        %1066 = vmatpush.msra.mxu0 0.0
        %v1067 = vand.u32 %v795, 4294901760
        %v1068 = vsub.f32 %v795, %v1067
        %1069 = vmatpush.msra.mxu0 %v1068
        %v1070 = vand.u32 %v791, 4294901760
        %v1071 = vsub.f32 %v791, %v1070
        %1072 = vmatpush.msra.mxu0 %v1071
        %v1073 = vand.u32 %v993, 4294901760
        %v1074 = vsub.f32 %v993, %v1073
        %1075 = vmatmul.f32.gmra.mxu0 %v1074
        %v1076 = vpop.f32.mrf.mxu0
        %v1077 = vadd.f32 %v1051, %v1076
        %1078 = vdwg.mxu0
        %1079 = vmatpush.msra.mxu0 0.0
        %1080 = vmatpush.msra.mxu0 0.0
        %1081 = vmatpush.msra.mxu0 0.0
        %1082 = vmatpush.msra.mxu0 0.0
        %1083 = vmatpush.msra.mxu0 0.0
        %1084 = vmatpush.msra.mxu0 0.0
        %1085 = vmatpush.msra.mxu0 0.0
        %1086 = vmatpush.msra.mxu0 0.0
        %1087 = vmatpush.msra.mxu0 0.0
        %1088 = vmatpush.msra.mxu0 0.0
        %1089 = vmatpush.msra.mxu0 0.0
        %1090 = vmatpush.msra.mxu0 0.0
        %1091 = vmatpush.msra.mxu0 0.0
        %1092 = vmatpush.msra.mxu0 0.0
        %v1093 = vand.u32 %v795, 4294901760
        %1094 = vmatpush.msra.mxu0 %v1093
        %v1095 = vand.u32 %v791, 4294901760
        %1096 = vmatpush.msra.mxu0 %v1095
        %v1097 = vand.u32 %v993, 4294901760
        %v1098 = vsub.f32 %v993, %v1097
        %v1099 = vand.u32 %v1098, 4294901760
        %1100 = vmatmul.f32.gmra.mxu0 %v1099
        %v1101 = vpop.f32.mrf.mxu0
        %v1102 = vadd.f32 %v1077, %v1101
        %1103 = vdwg.mxu0
        %1104 = vmatpush.msra.mxu0 0.0
        %1105 = vmatpush.msra.mxu0 0.0
        %1106 = vmatpush.msra.mxu0 0.0
        %1107 = vmatpush.msra.mxu0 0.0
        %1108 = vmatpush.msra.mxu0 0.0
        %1109 = vmatpush.msra.mxu0 0.0
        %1110 = vmatpush.msra.mxu0 0.0
        %1111 = vmatpush.msra.mxu0 0.0
        %1112 = vmatpush.msra.mxu0 0.0
        %1113 = vmatpush.msra.mxu0 0.0
        %1114 = vmatpush.msra.mxu0 0.0
        %1115 = vmatpush.msra.mxu0 0.0
        %1116 = vmatpush.msra.mxu0 0.0
        %1117 = vmatpush.msra.mxu0 0.0
        %v1118 = vand.u32 %v795, 4294901760
        %v1119 = vsub.f32 %v795, %v1118
        %v1120 = vand.u32 %v1119, 4294901760
        %1121 = vmatpush.msra.mxu0 %v1120
        %v1122 = vand.u32 %v791, 4294901760
        %v1123 = vsub.f32 %v791, %v1122
        %v1124 = vand.u32 %v1123, 4294901760
        %1125 = vmatpush.msra.mxu0 %v1124
        %v1126 = vand.u32 %v993, 4294901760
        %1127 = vmatmul.f32.gmra.mxu0 %v1126
        %v1128 = vpop.f32.mrf.mxu0
        %v1129 = vadd.f32 %v1102, %v1128
        %1130 = vdwg.mxu0
        %1131 = vmatpush.msra.mxu0 0.0
        %1132 = vmatpush.msra.mxu0 0.0
        %1133 = vmatpush.msra.mxu0 0.0
        %1134 = vmatpush.msra.mxu0 0.0
        %1135 = vmatpush.msra.mxu0 0.0
        %1136 = vmatpush.msra.mxu0 0.0
        %1137 = vmatpush.msra.mxu0 0.0
        %1138 = vmatpush.msra.mxu0 0.0
        %1139 = vmatpush.msra.mxu0 0.0
        %1140 = vmatpush.msra.mxu0 0.0
        %1141 = vmatpush.msra.mxu0 0.0
        %1142 = vmatpush.msra.mxu0 0.0
        %1143 = vmatpush.msra.mxu0 0.0
        %1144 = vmatpush.msra.mxu0 0.0
        %v1145 = vand.u32 %v795, 4294901760
        %1146 = vmatpush.msra.mxu0 %v1145
        %v1147 = vand.u32 %v791, 4294901760
        %1148 = vmatpush.msra.mxu0 %v1147
        %v1149 = vand.u32 %v993, 4294901760
        %1150 = vmatmul.f32.gmra.mxu0 %v1149
        %v1151 = vpop.f32.mrf.mxu0
        %v1152 = vadd.f32 %v1129, %v1151
        %1153 = vdwg.mxu0
        %1154 = vmatpush.msra.mxu0 0.0
        %1155 = vmatpush.msra.mxu0 0.0
        %1156 = vmatpush.msra.mxu0 0.0
        %1157 = vmatpush.msra.mxu0 0.0
        %1158 = vmatpush.msra.mxu0 0.0
        %1159 = vmatpush.msra.mxu0 0.0
        %1160 = vmatpush.msra.mxu0 0.0
        %1161 = vmatpush.msra.mxu0 0.0
        %1162 = vmatpush.msra.mxu0 0.0
        %1163 = vmatpush.msra.mxu0 0.0
        %1164 = vmatpush.msra.mxu0 0.0
        %1165 = vmatpush.msra.mxu0 0.0
        %1166 = vmatpush.msra.mxu0 0.0
        %1167 = vmatpush.msra.mxu0 0.0
        %v1168 = vand.u32 %v987, 4294901760
        %1169 = vmatpush.msra.mxu0 %v1168
        %v1170 = vand.u32 %v983, 4294901760
        %1171 = vmatpush.msra.mxu0 %v1170
        %v1172 = vand.u32 %v993, 4294901760
        %v1173 = vsub.f32 %v993, %v1172
        %v1174 = vand.u32 %v1173, 4294901760
        %v1175 = vsub.f32 %v1173, %v1174
        %v1176 = vand.u32 %v1175, 4294901760
        %1177 = vmatmul.f32.gmra.mxu0 %v1176
        %v1178 = vpop.f32.mrf.mxu0
        %v1179 = vadd.f32 0.0, %v1178
        %1180 = vdwg.mxu0
        %1181 = vmatpush.msra.mxu0 0.0
        %1182 = vmatpush.msra.mxu0 0.0
        %1183 = vmatpush.msra.mxu0 0.0
        %1184 = vmatpush.msra.mxu0 0.0
        %1185 = vmatpush.msra.mxu0 0.0
        %1186 = vmatpush.msra.mxu0 0.0
        %1187 = vmatpush.msra.mxu0 0.0
        %1188 = vmatpush.msra.mxu0 0.0
        %1189 = vmatpush.msra.mxu0 0.0
        %1190 = vmatpush.msra.mxu0 0.0
        %1191 = vmatpush.msra.mxu0 0.0
        %1192 = vmatpush.msra.mxu0 0.0
        %1193 = vmatpush.msra.mxu0 0.0
        %1194 = vmatpush.msra.mxu0 0.0
        %v1195 = vand.u32 %v987, 4294901760
        %v1196 = vsub.f32 %v987, %v1195
        %v1197 = vand.u32 %v1196, 4294901760
        %v1198 = vsub.f32 %v1196, %v1197
        %v1199 = vand.u32 %v1198, 4294901760
        %1200 = vmatpush.msra.mxu0 %v1199
        %v1201 = vand.u32 %v983, 4294901760
        %v1202 = vsub.f32 %v983, %v1201
        %v1203 = vand.u32 %v1202, 4294901760
        %v1204 = vsub.f32 %v1202, %v1203
        %v1205 = vand.u32 %v1204, 4294901760
        %1206 = vmatpush.msra.mxu0 %v1205
        %v1207 = vand.u32 %v993, 4294901760
        %1208 = vmatmul.f32.gmra.mxu0 %v1207
        %v1209 = vpop.f32.mrf.mxu0
        %v1210 = vadd.f32 %v1179, %v1209
        %1211 = vdwg.mxu0
        %1212 = vmatpush.msra.mxu0 0.0
        %1213 = vmatpush.msra.mxu0 0.0
        %1214 = vmatpush.msra.mxu0 0.0
        %1215 = vmatpush.msra.mxu0 0.0
        %1216 = vmatpush.msra.mxu0 0.0
        %1217 = vmatpush.msra.mxu0 0.0
        %1218 = vmatpush.msra.mxu0 0.0
        %1219 = vmatpush.msra.mxu0 0.0
        %1220 = vmatpush.msra.mxu0 0.0
        %1221 = vmatpush.msra.mxu0 0.0
        %1222 = vmatpush.msra.mxu0 0.0
        %1223 = vmatpush.msra.mxu0 0.0
        %1224 = vmatpush.msra.mxu0 0.0
        %1225 = vmatpush.msra.mxu0 0.0
        %v1226 = vand.u32 %v987, 4294901760
        %v1227 = vsub.f32 %v987, %v1226
        %1228 = vmatpush.msra.mxu0 %v1227
        %v1229 = vand.u32 %v983, 4294901760
        %v1230 = vsub.f32 %v983, %v1229
        %1231 = vmatpush.msra.mxu0 %v1230
        %v1232 = vand.u32 %v993, 4294901760
        %v1233 = vsub.f32 %v993, %v1232
        %1234 = vmatmul.f32.gmra.mxu0 %v1233
        %v1235 = vpop.f32.mrf.mxu0
        %v1236 = vadd.f32 %v1210, %v1235
        %1237 = vdwg.mxu0
        %1238 = vmatpush.msra.mxu0 0.0
        %1239 = vmatpush.msra.mxu0 0.0
        %1240 = vmatpush.msra.mxu0 0.0
        %1241 = vmatpush.msra.mxu0 0.0
        %1242 = vmatpush.msra.mxu0 0.0
        %1243 = vmatpush.msra.mxu0 0.0
        %1244 = vmatpush.msra.mxu0 0.0
        %1245 = vmatpush.msra.mxu0 0.0
        %1246 = vmatpush.msra.mxu0 0.0
        %1247 = vmatpush.msra.mxu0 0.0
        %1248 = vmatpush.msra.mxu0 0.0
        %1249 = vmatpush.msra.mxu0 0.0
        %1250 = vmatpush.msra.mxu0 0.0
        %1251 = vmatpush.msra.mxu0 0.0
        %v1252 = vand.u32 %v987, 4294901760
        %1253 = vmatpush.msra.mxu0 %v1252
        %v1254 = vand.u32 %v983, 4294901760
        %1255 = vmatpush.msra.mxu0 %v1254
        %v1256 = vand.u32 %v993, 4294901760
        %v1257 = vsub.f32 %v993, %v1256
        %v1258 = vand.u32 %v1257, 4294901760
        %1259 = vmatmul.f32.gmra.mxu0 %v1258
        %v1260 = vpop.f32.mrf.mxu0
        %v1261 = vadd.f32 %v1236, %v1260
        %1262 = vdwg.mxu0
        %1263 = vmatpush.msra.mxu0 0.0
        %1264 = vmatpush.msra.mxu0 0.0
        %1265 = vmatpush.msra.mxu0 0.0
        %1266 = vmatpush.msra.mxu0 0.0
        %1267 = vmatpush.msra.mxu0 0.0
        %1268 = vmatpush.msra.mxu0 0.0
        %1269 = vmatpush.msra.mxu0 0.0
        %1270 = vmatpush.msra.mxu0 0.0
        %1271 = vmatpush.msra.mxu0 0.0
        %1272 = vmatpush.msra.mxu0 0.0
        %1273 = vmatpush.msra.mxu0 0.0
        %1274 = vmatpush.msra.mxu0 0.0
        %1275 = vmatpush.msra.mxu0 0.0
        %1276 = vmatpush.msra.mxu0 0.0
        %v1277 = vand.u32 %v987, 4294901760
        %v1278 = vsub.f32 %v987, %v1277
        %v1279 = vand.u32 %v1278, 4294901760
        %1280 = vmatpush.msra.mxu0 %v1279
        %v1281 = vand.u32 %v983, 4294901760
        %v1282 = vsub.f32 %v983, %v1281
        %v1283 = vand.u32 %v1282, 4294901760
        %1284 = vmatpush.msra.mxu0 %v1283
        %v1285 = vand.u32 %v993, 4294901760
        %1286 = vmatmul.f32.gmra.mxu0 %v1285
        %v1287 = vpop.f32.mrf.mxu0
        %v1288 = vadd.f32 %v1261, %v1287
        %1289 = vdwg.mxu0
        %1290 = vmatpush.msra.mxu0 0.0
        %1291 = vmatpush.msra.mxu0 0.0
        %1292 = vmatpush.msra.mxu0 0.0
        %1293 = vmatpush.msra.mxu0 0.0
        %1294 = vmatpush.msra.mxu0 0.0
        %1295 = vmatpush.msra.mxu0 0.0
        %1296 = vmatpush.msra.mxu0 0.0
        %1297 = vmatpush.msra.mxu0 0.0
        %1298 = vmatpush.msra.mxu0 0.0
        %1299 = vmatpush.msra.mxu0 0.0
        %1300 = vmatpush.msra.mxu0 0.0
        %1301 = vmatpush.msra.mxu0 0.0
        %1302 = vmatpush.msra.mxu0 0.0
        %1303 = vmatpush.msra.mxu0 0.0
        %v1304 = vand.u32 %v987, 4294901760
        %1305 = vmatpush.msra.mxu0 %v1304
        %v1306 = vand.u32 %v983, 4294901760
        %1307 = vmatpush.msra.mxu0 %v1306
        %v1308 = vand.u32 %v993, 4294901760
        %1309 = vmatmul.f32.gmra.mxu0 %v1308
        %v1310 = vpop.f32.mrf.mxu0
        %v1311 = vadd.f32 %v1288, %v1310
        %1312 = vdwg.mxu0
        %v1314 = vsel %vm408, %v990, 0
        %1316 = vmatpush.msra.mxu0 0.0
        %1317 = vmatpush.msra.mxu0 0.0
        %1318 = vmatpush.msra.mxu0 0.0
        %1319 = vmatpush.msra.mxu0 0.0
        %1320 = vmatpush.msra.mxu0 0.0
        %1321 = vmatpush.msra.mxu0 0.0
        %1322 = vmatpush.msra.mxu0 0.0
        %1323 = vmatpush.msra.mxu0 0.0
        %1324 = vmatpush.msra.mxu0 0.0
        %1325 = vmatpush.msra.mxu0 0.0
        %1326 = vmatpush.msra.mxu0 0.0
        %1327 = vmatpush.msra.mxu0 0.0
        %1328 = vmatpush.msra.mxu0 0.0
        %1329 = vmatpush.msra.mxu0 0.0
        %v1330 = vand.u32 %v603, 4294901760
        %1331 = vmatpush.msra.mxu0 %v1330
        %v1332 = vand.u32 %v599, 4294901760
        %1333 = vmatpush.msra.mxu0 %v1332
        %v1334 = vand.u32 %v1314, 4294901760
        %v1335 = vsub.f32 %v1314, %v1334
        %v1336 = vand.u32 %v1335, 4294901760
        %v1337 = vsub.f32 %v1335, %v1336
        %v1338 = vand.u32 %v1337, 4294901760
        %1339 = vmatmul.f32.gmra.mxu0 %v1338
        %v1340 = vpop.f32.mrf.mxu0
        %v1341 = vadd.f32 0.0, %v1340
        %1342 = vdwg.mxu0
        %1343 = vmatpush.msra.mxu0 0.0
        %1344 = vmatpush.msra.mxu0 0.0
        %1345 = vmatpush.msra.mxu0 0.0
        %1346 = vmatpush.msra.mxu0 0.0
        %1347 = vmatpush.msra.mxu0 0.0
        %1348 = vmatpush.msra.mxu0 0.0
        %1349 = vmatpush.msra.mxu0 0.0
        %1350 = vmatpush.msra.mxu0 0.0
        %1351 = vmatpush.msra.mxu0 0.0
        %1352 = vmatpush.msra.mxu0 0.0
        %1353 = vmatpush.msra.mxu0 0.0
        %1354 = vmatpush.msra.mxu0 0.0
        %1355 = vmatpush.msra.mxu0 0.0
        %1356 = vmatpush.msra.mxu0 0.0
        %v1357 = vand.u32 %v603, 4294901760
        %v1358 = vsub.f32 %v603, %v1357
        %v1359 = vand.u32 %v1358, 4294901760
        %v1360 = vsub.f32 %v1358, %v1359
        %v1361 = vand.u32 %v1360, 4294901760
        %1362 = vmatpush.msra.mxu0 %v1361
        %v1363 = vand.u32 %v599, 4294901760
        %v1364 = vsub.f32 %v599, %v1363
        %v1365 = vand.u32 %v1364, 4294901760
        %v1366 = vsub.f32 %v1364, %v1365
        %v1367 = vand.u32 %v1366, 4294901760
        %1368 = vmatpush.msra.mxu0 %v1367
        %v1369 = vand.u32 %v1314, 4294901760
        %1370 = vmatmul.f32.gmra.mxu0 %v1369
        %v1371 = vpop.f32.mrf.mxu0
        %v1372 = vadd.f32 %v1341, %v1371
        %1373 = vdwg.mxu0
        %1374 = vmatpush.msra.mxu0 0.0
        %1375 = vmatpush.msra.mxu0 0.0
        %1376 = vmatpush.msra.mxu0 0.0
        %1377 = vmatpush.msra.mxu0 0.0
        %1378 = vmatpush.msra.mxu0 0.0
        %1379 = vmatpush.msra.mxu0 0.0
        %1380 = vmatpush.msra.mxu0 0.0
        %1381 = vmatpush.msra.mxu0 0.0
        %1382 = vmatpush.msra.mxu0 0.0
        %1383 = vmatpush.msra.mxu0 0.0
        %1384 = vmatpush.msra.mxu0 0.0
        %1385 = vmatpush.msra.mxu0 0.0
        %1386 = vmatpush.msra.mxu0 0.0
        %1387 = vmatpush.msra.mxu0 0.0
        %v1388 = vand.u32 %v603, 4294901760
        %v1389 = vsub.f32 %v603, %v1388
        %1390 = vmatpush.msra.mxu0 %v1389
        %v1391 = vand.u32 %v599, 4294901760
        %v1392 = vsub.f32 %v599, %v1391
        %1393 = vmatpush.msra.mxu0 %v1392
        %v1394 = vand.u32 %v1314, 4294901760
        %v1395 = vsub.f32 %v1314, %v1394
        %1396 = vmatmul.f32.gmra.mxu0 %v1395
        %v1397 = vpop.f32.mrf.mxu0
        %v1398 = vadd.f32 %v1372, %v1397
        %1399 = vdwg.mxu0
        %1400 = vmatpush.msra.mxu0 0.0
        %1401 = vmatpush.msra.mxu0 0.0
        %1402 = vmatpush.msra.mxu0 0.0
        %1403 = vmatpush.msra.mxu0 0.0
        %1404 = vmatpush.msra.mxu0 0.0
        %1405 = vmatpush.msra.mxu0 0.0
        %1406 = vmatpush.msra.mxu0 0.0
        %1407 = vmatpush.msra.mxu0 0.0
        %1408 = vmatpush.msra.mxu0 0.0
        %1409 = vmatpush.msra.mxu0 0.0
        %1410 = vmatpush.msra.mxu0 0.0
        %1411 = vmatpush.msra.mxu0 0.0
        %1412 = vmatpush.msra.mxu0 0.0
        %1413 = vmatpush.msra.mxu0 0.0
        %v1414 = vand.u32 %v603, 4294901760
        %1415 = vmatpush.msra.mxu0 %v1414
        %v1416 = vand.u32 %v599, 4294901760
        %1417 = vmatpush.msra.mxu0 %v1416
        %v1418 = vand.u32 %v1314, 4294901760
        %v1419 = vsub.f32 %v1314, %v1418
        %v1420 = vand.u32 %v1419, 4294901760
        %1421 = vmatmul.f32.gmra.mxu0 %v1420
        %v1422 = vpop.f32.mrf.mxu0
        %v1423 = vadd.f32 %v1398, %v1422
        %1424 = vdwg.mxu0
        %1425 = vmatpush.msra.mxu0 0.0
        %1426 = vmatpush.msra.mxu0 0.0
        %1427 = vmatpush.msra.mxu0 0.0
        %1428 = vmatpush.msra.mxu0 0.0
        %1429 = vmatpush.msra.mxu0 0.0
        %1430 = vmatpush.msra.mxu0 0.0
        %1431 = vmatpush.msra.mxu0 0.0
        %1432 = vmatpush.msra.mxu0 0.0
        %1433 = vmatpush.msra.mxu0 0.0
        %1434 = vmatpush.msra.mxu0 0.0
        %1435 = vmatpush.msra.mxu0 0.0
        %1436 = vmatpush.msra.mxu0 0.0
        %1437 = vmatpush.msra.mxu0 0.0
        %1438 = vmatpush.msra.mxu0 0.0
        %v1439 = vand.u32 %v603, 4294901760
        %v1440 = vsub.f32 %v603, %v1439
        %v1441 = vand.u32 %v1440, 4294901760
        %1442 = vmatpush.msra.mxu0 %v1441
        %v1443 = vand.u32 %v599, 4294901760
        %v1444 = vsub.f32 %v599, %v1443
        %v1445 = vand.u32 %v1444, 4294901760
        %1446 = vmatpush.msra.mxu0 %v1445
        %v1447 = vand.u32 %v1314, 4294901760
        %1448 = vmatmul.f32.gmra.mxu0 %v1447
        %v1449 = vpop.f32.mrf.mxu0
        %v1450 = vadd.f32 %v1423, %v1449
        %1451 = vdwg.mxu0
        %1452 = vmatpush.msra.mxu0 0.0
        %1453 = vmatpush.msra.mxu0 0.0
        %1454 = vmatpush.msra.mxu0 0.0
        %1455 = vmatpush.msra.mxu0 0.0
        %1456 = vmatpush.msra.mxu0 0.0
        %1457 = vmatpush.msra.mxu0 0.0
        %1458 = vmatpush.msra.mxu0 0.0
        %1459 = vmatpush.msra.mxu0 0.0
        %1460 = vmatpush.msra.mxu0 0.0
        %1461 = vmatpush.msra.mxu0 0.0
        %1462 = vmatpush.msra.mxu0 0.0
        %1463 = vmatpush.msra.mxu0 0.0
        %1464 = vmatpush.msra.mxu0 0.0
        %1465 = vmatpush.msra.mxu0 0.0
        %v1466 = vand.u32 %v603, 4294901760
        %1467 = vmatpush.msra.mxu0 %v1466
        %v1468 = vand.u32 %v599, 4294901760
        %1469 = vmatpush.msra.mxu0 %v1468
        %v1470 = vand.u32 %v1314, 4294901760
        %1471 = vmatmul.f32.gmra.mxu0 %v1470
        %v1472 = vpop.f32.mrf.mxu0
        %v1473 = vadd.f32 %v1450, %v1472
        %1474 = vdwg.mxu0
        %v1476 = vsel %vm408, %v991, 0
        %1478 = vmatpush.msra.mxu0 0.0
        %1479 = vmatpush.msra.mxu0 0.0
        %1480 = vmatpush.msra.mxu0 0.0
        %1481 = vmatpush.msra.mxu0 0.0
        %1482 = vmatpush.msra.mxu0 0.0
        %1483 = vmatpush.msra.mxu0 0.0
        %1484 = vmatpush.msra.mxu0 0.0
        %1485 = vmatpush.msra.mxu0 0.0
        %1486 = vmatpush.msra.mxu0 0.0
        %1487 = vmatpush.msra.mxu0 0.0
        %1488 = vmatpush.msra.mxu0 0.0
        %1489 = vmatpush.msra.mxu0 0.0
        %1490 = vmatpush.msra.mxu0 0.0
        %1491 = vmatpush.msra.mxu0 0.0
        %v1492 = vand.u32 %v603, 4294901760
        %1493 = vmatpush.msra.mxu0 %v1492
        %v1494 = vand.u32 %v599, 4294901760
        %1495 = vmatpush.msra.mxu0 %v1494
        %v1496 = vand.u32 %v1476, 4294901760
        %v1497 = vsub.f32 %v1476, %v1496
        %v1498 = vand.u32 %v1497, 4294901760
        %v1499 = vsub.f32 %v1497, %v1498
        %v1500 = vand.u32 %v1499, 4294901760
        %1501 = vmatmul.f32.gmra.mxu0 %v1500
        %v1502 = vpop.f32.mrf.mxu0
        %v1503 = vadd.f32 0.0, %v1502
        %1504 = vdwg.mxu0
        %1505 = vmatpush.msra.mxu0 0.0
        %1506 = vmatpush.msra.mxu0 0.0
        %1507 = vmatpush.msra.mxu0 0.0
        %1508 = vmatpush.msra.mxu0 0.0
        %1509 = vmatpush.msra.mxu0 0.0
        %1510 = vmatpush.msra.mxu0 0.0
        %1511 = vmatpush.msra.mxu0 0.0
        %1512 = vmatpush.msra.mxu0 0.0
        %1513 = vmatpush.msra.mxu0 0.0
        %1514 = vmatpush.msra.mxu0 0.0
        %1515 = vmatpush.msra.mxu0 0.0
        %1516 = vmatpush.msra.mxu0 0.0
        %1517 = vmatpush.msra.mxu0 0.0
        %1518 = vmatpush.msra.mxu0 0.0
        %v1519 = vand.u32 %v603, 4294901760
        %v1520 = vsub.f32 %v603, %v1519
        %v1521 = vand.u32 %v1520, 4294901760
        %v1522 = vsub.f32 %v1520, %v1521
        %v1523 = vand.u32 %v1522, 4294901760
        %1524 = vmatpush.msra.mxu0 %v1523
        %v1525 = vand.u32 %v599, 4294901760
        %v1526 = vsub.f32 %v599, %v1525
        %v1527 = vand.u32 %v1526, 4294901760
        %v1528 = vsub.f32 %v1526, %v1527
        %v1529 = vand.u32 %v1528, 4294901760
        %1530 = vmatpush.msra.mxu0 %v1529
        %v1531 = vand.u32 %v1476, 4294901760
        %1532 = vmatmul.f32.gmra.mxu0 %v1531
        %v1533 = vpop.f32.mrf.mxu0
        %v1534 = vadd.f32 %v1503, %v1533
        %1535 = vdwg.mxu0
        %1536 = vmatpush.msra.mxu0 0.0
        %1537 = vmatpush.msra.mxu0 0.0
        %1538 = vmatpush.msra.mxu0 0.0
        %1539 = vmatpush.msra.mxu0 0.0
        %1540 = vmatpush.msra.mxu0 0.0
        %1541 = vmatpush.msra.mxu0 0.0
        %1542 = vmatpush.msra.mxu0 0.0
        %1543 = vmatpush.msra.mxu0 0.0
        %1544 = vmatpush.msra.mxu0 0.0
        %1545 = vmatpush.msra.mxu0 0.0
        %1546 = vmatpush.msra.mxu0 0.0
        %1547 = vmatpush.msra.mxu0 0.0
        %1548 = vmatpush.msra.mxu0 0.0
        %1549 = vmatpush.msra.mxu0 0.0
        %v1550 = vand.u32 %v603, 4294901760
        %v1551 = vsub.f32 %v603, %v1550
        %1552 = vmatpush.msra.mxu0 %v1551
        %v1553 = vand.u32 %v599, 4294901760
        %v1554 = vsub.f32 %v599, %v1553
        %1555 = vmatpush.msra.mxu0 %v1554
        %v1556 = vand.u32 %v1476, 4294901760
        %v1557 = vsub.f32 %v1476, %v1556
        %1558 = vmatmul.f32.gmra.mxu0 %v1557
        %v1559 = vpop.f32.mrf.mxu0
        %v1560 = vadd.f32 %v1534, %v1559
        %1561 = vdwg.mxu0
        %1562 = vmatpush.msra.mxu0 0.0
        %1563 = vmatpush.msra.mxu0 0.0
        %1564 = vmatpush.msra.mxu0 0.0
        %1565 = vmatpush.msra.mxu0 0.0
        %1566 = vmatpush.msra.mxu0 0.0
        %1567 = vmatpush.msra.mxu0 0.0
        %1568 = vmatpush.msra.mxu0 0.0
        %1569 = vmatpush.msra.mxu0 0.0
        %1570 = vmatpush.msra.mxu0 0.0
        %1571 = vmatpush.msra.mxu0 0.0
        %1572 = vmatpush.msra.mxu0 0.0
        %1573 = vmatpush.msra.mxu0 0.0
        %1574 = vmatpush.msra.mxu0 0.0
        %1575 = vmatpush.msra.mxu0 0.0
        %v1576 = vand.u32 %v603, 4294901760
        %1577 = vmatpush.msra.mxu0 %v1576
        %v1578 = vand.u32 %v599, 4294901760
        %1579 = vmatpush.msra.mxu0 %v1578
        %v1580 = vand.u32 %v1476, 4294901760
        %v1581 = vsub.f32 %v1476, %v1580
        %v1582 = vand.u32 %v1581, 4294901760
        %1583 = vmatmul.f32.gmra.mxu0 %v1582
        %v1584 = vpop.f32.mrf.mxu0
        %v1585 = vadd.f32 %v1560, %v1584
        %1586 = vdwg.mxu0
        %1587 = vmatpush.msra.mxu0 0.0
        %1588 = vmatpush.msra.mxu0 0.0
        %1589 = vmatpush.msra.mxu0 0.0
        %1590 = vmatpush.msra.mxu0 0.0
        %1591 = vmatpush.msra.mxu0 0.0
        %1592 = vmatpush.msra.mxu0 0.0
        %1593 = vmatpush.msra.mxu0 0.0
        %1594 = vmatpush.msra.mxu0 0.0
        %1595 = vmatpush.msra.mxu0 0.0
        %1596 = vmatpush.msra.mxu0 0.0
        %1597 = vmatpush.msra.mxu0 0.0
        %1598 = vmatpush.msra.mxu0 0.0
        %1599 = vmatpush.msra.mxu0 0.0
        %1600 = vmatpush.msra.mxu0 0.0
        %v1601 = vand.u32 %v603, 4294901760
        %v1602 = vsub.f32 %v603, %v1601
        %v1603 = vand.u32 %v1602, 4294901760
        %1604 = vmatpush.msra.mxu0 %v1603
        %v1605 = vand.u32 %v599, 4294901760
        %v1606 = vsub.f32 %v599, %v1605
        %v1607 = vand.u32 %v1606, 4294901760
        %1608 = vmatpush.msra.mxu0 %v1607
        %v1609 = vand.u32 %v1476, 4294901760
        %1610 = vmatmul.f32.gmra.mxu0 %v1609
        %v1611 = vpop.f32.mrf.mxu0
        %v1612 = vadd.f32 %v1585, %v1611
        %1613 = vdwg.mxu0
        %1614 = vmatpush.msra.mxu0 0.0
        %1615 = vmatpush.msra.mxu0 0.0
        %1616 = vmatpush.msra.mxu0 0.0
        %1617 = vmatpush.msra.mxu0 0.0
        %1618 = vmatpush.msra.mxu0 0.0
        %1619 = vmatpush.msra.mxu0 0.0
        %1620 = vmatpush.msra.mxu0 0.0
        %1621 = vmatpush.msra.mxu0 0.0
        %1622 = vmatpush.msra.mxu0 0.0
        %1623 = vmatpush.msra.mxu0 0.0
        %1624 = vmatpush.msra.mxu0 0.0
        %1625 = vmatpush.msra.mxu0 0.0
        %1626 = vmatpush.msra.mxu0 0.0
        %1627 = vmatpush.msra.mxu0 0.0
        %v1628 = vand.u32 %v603, 4294901760
        %1629 = vmatpush.msra.mxu0 %v1628
        %v1630 = vand.u32 %v599, 4294901760
        %1631 = vmatpush.msra.mxu0 %v1630
        %v1632 = vand.u32 %v1476, 4294901760
        %1633 = vmatmul.f32.gmra.mxu0 %v1632
        %v1634 = vpop.f32.mrf.mxu0
        %v1635 = vadd.f32 %v1612, %v1634
        %1636 = vdwg.mxu0
        %v1637 = vmul.f32 %v1152, %v1152
        %v1638 = vmul.f32 %v1311, %v1311
        %v1639 = vadd.f32 %v1637, %v1638
        %v1640 = vmul.f32 %v1473, %v1473
        %v1641 = vadd.f32 %v1639, %v1640
        %v1642 = vmul.f32 %v1635, %v1635
        %v1643 = vadd.f32 %v1641, %v1642
        %vm1644 = vcmask 27648
        %1645 = vst.msk [vmem:[%s367] sm:$0xf] %vm1644, %v1643
        %s1646 = sand.u32 %s214, 1
        %s1647 = scalar_lea.sflag [#allocation4], %s1646
        %s1648 = sand.u32 %s214, 1
        %s1649 = smul.addr %s1648, 4
        %s1650 = scalar_lea.vmem [#allocation7], %s1649
        // Predicated region
        $region61: #{tpu_custom_call.1} parent=51 // pred_check
          %p1651 = pneg %p224
        $region62: #{tpu_custom_call.1} parent=51 // pred_check_branch
          %1653 = sbr.rel (%p1651) target = $region64
        $region63: #{tpu_custom_call.1} parent=51 // pred_region
          %1655 = vsyncadd %s1647, 0
          %s1656 = smul.addr %s28, 4
          %s1657 = scalar_lea.hbm %s8, %s1656
          %s1659 = sshll.u32 %s1650, 4
          %s1660 = int_to_ptr.vmem [resolvable:$true] %s1659
          %s1661 = sshll.u32 %s1657, 4
          %s1662 = int_to_ptr.hbm [resolvable:$true] %s1661
          %1664 = dma.vmem_to_hbm [thread:$0]  %s1660, 64, %s1662, %s1647
        $region64: #{tpu_custom_call.1} parent=51 // pred_fallthru
          _
      $region52: #{tpu_custom_call.1} parent=5 // pred_fallthru
        _
      %p1665 = scmp.le.s32.totalorder 2, %s23
      // Predicated region
      $region65: #{tpu_custom_call.1} parent=5 // pred_check
        %p1666 = pneg %p1665
      $region66: #{tpu_custom_call.1} parent=5 // pred_check_branch
        %1668 = sbr.rel (%p1666) target = $region68
      $region67: #{tpu_custom_call.1} parent=5 // pred_region
        %s1669 = ssub.s32 %s23, 2
        // Predicated region
        $region69: #{tpu_custom_call.1} parent=67 // pred_check
          %p1670 = pneg %p230
        $region70: #{tpu_custom_call.1} parent=67 // pred_check_branch
          %1672 = sbr.rel (%p1670) target = $region72
        $region71: #{tpu_custom_call.1} parent=67 // pred_region
          %s1673 = sand.u32 %s215, 1
          %s1674 = scalar_lea.sflag [#allocation4], %s1673
          %s1675 = sand.u32 %s215, 1
          %s1676 = smul.addr %s1675, 4
          %s1677 = scalar_lea.vmem [#allocation7], %s1676
          %1679 = dma.done %s1674, 64
        $region72: #{tpu_custom_call.1} parent=67 // pred_fallthru
          _
      $region68: #{tpu_custom_call.1} parent=5 // pred_fallthru
        _
    $region6: #{tpu_custom_call.1} parent=1 // loop_footer
      %s27 = sadd.s32 1, %s23
    $region7: #{tpu_custom_call.1} parent=1 // loop_footer_branch
      %22 = sbr.rel target = $region3
    $region8: #{tpu_custom_call.1} parent=1 // loop_exit
      _
    %1680 = vsyncpa [#allocation3], 1
    %s1681 = scalar_lea.sflag [#allocation3], 1
    %1682 = vsyncpa %s1681, 1
    %1683 = vsyncpa [#allocation6], 1
    %s1684 = scalar_lea.sflag [#allocation6], 1
    %1685 = vsyncpa %s1684, 1
    %1686 = vsyncpa [#allocation4], 1
    %s1687 = scalar_lea.sflag [#allocation4], 1
    %1688 = vsyncpa %s1687, 1

</llo_original>
